<compile_context>
chip_gen: v7x
topology: tpu7x:2x2x1
jax: 0.10.0
libtpu: 0.0.40
codegen_flags: <defaults>
</compile_context>

<pallas_src>
import jax
import jax.numpy as jnp
from jax import lax
from jax.experimental import pallas as pl
from jax.experimental.pallas import tpu as pltpu

_LANE = 128


def _make_resblock_kernel(*, Nb, Cin, Cout, k, s, d, p, H, W, H1, W1, H2, W2,
                          Hr, Wr, transposed_out, has_projection):
    """Builds the per-batch-tile ResBlock kernel with all dims baked in."""
    M2 = Nb * H2 * W2
    K2 = k * k * Cout
    conv1_by_taps = Cin >= _LANE    # K=Cin already fills the MXU contraction
    conv2_by_taps = Cout >= _LANE

    def lrelu(v):
        return jnp.where(v > 0, v, 0.2 * v)

    def win(v, h0, w0, Ho, Wo, step):
        # (Nb, Ho, Wo, C) shifted window of a (Nb, Hsrc, Wsrc, C) value.
        if step == 1:
            return v[:, h0:h0 + Ho, w0:w0 + Wo, :]
        return v[:, h0:h0 + (Ho - 1) * step + 1:step,
                 w0:w0 + (Wo - 1) * step + 1:step, :]

    def pad_hw(v, Hc, Wc, C):
        # Value-level zero pad by p on H/W via concat with zero slabs
        # (replaces the old VMEM-scratch store + reload).
        if p == 0:
            return v
        zr = jnp.zeros((Nb, p, Wc, C), v.dtype)
        v = jnp.concatenate([zr, v, zr], axis=1)
        zc = jnp.zeros((Nb, Hc + 2 * p, p, C), v.dtype)
        return jnp.concatenate([zc, v, zc], axis=2)

    def taps(v, Ho, Wo, step):
        return [win(v, kh * d, kw * d, Ho, Wo, step)
                for kh in range(k) for kw in range(k)]

    def im2col(v, Ho, Wo, step, c):
        # bf16 taps concatenated along the contraction axis -> one MXU matmul.
        slab = jnp.concatenate(taps(v, Ho, Wo, step), axis=-1)
        return slab.reshape(Nb * Ho * Wo, k * k * c)

    def conv_taps(v, Ho, Wo, step, c, w_ref):
        # Per-tap accumulation (no k*k slab materialization); used when the
        # per-tap contraction dim c already fills the MXU (c >= 128).
        tps = taps(v, Ho, Wo, step)
        M = Nb * Ho * Wo
        acc = jnp.dot(tps[0].reshape(M, c), w_ref[pl.ds(0, c), :],
                      preferred_element_type=jnp.float32)
        for t in range(1, k * k):
            acc = acc + jnp.dot(tps[t].reshape(M, c),
                                w_ref[pl.ds(t * c, c), :],
                                preferred_element_type=jnp.float32)
        return acc

    def kernel(x_ref, w1_ref, b1_ref, w2_ref, b2_ref, out_ref):
        x = x_ref[...]                                  # (Nb, H, W, Cin) bf16
        xp = pad_hw(x, H, W, Cin)                       # (Nb, H+2p, W+2p, Cin)

        # ---- conv1 -> (M1, Cout), f32 accumulation ----
        if conv1_by_taps:
            h1 = conv_taps(xp, H1, W1, s, Cin, w1_ref)
        else:
            h1 = jnp.dot(im2col(xp, H1, W1, s, Cin), w1_ref[...],
                         preferred_element_type=jnp.float32)
        h1 = lrelu(h1 + b1_ref[...])

        # ---- value-level re-pad of the conv1 output (bf16) for conv2 ----
        y = pad_hw(h1.astype(jnp.bfloat16).reshape(Nb, H1, W1, Cout),
                   H1, W1, Cout)

        # Residual input: stride-s crop of the (unpadded) x tile, bf16.
        xin = win(x, 0, 0, Hr, Wr, s).reshape(M2, Cin)

        if transposed_out:
            # Cout < 128: compute transposed, (Cout, M2), so the long spatial
            # axis stays on the 128-lane axis (lane-dense, unmasked stores).
            # conv2 + residual fused into ONE dot: the residual window is one
            # extra K-tap, w2_ref = [w2^T | wp^T] (or [w2^T | I] for identity;
            # x is already bf16 so the eye adds no rounding, only Cin MACs).
            slabc = jnp.concatenate([im2col(y, H2, W2, 1, Cout), xin], axis=1)
            h2t = lax.dot_general(w2_ref[...], slabc,
                                  (((1,), (1,)), ((), ())),
                                  preferred_element_type=jnp.float32)
            out_ref[0] = lrelu(h2t + b2_ref[...]).astype(out_ref.dtype)
        else:
            # Cout >= 128: (M2, Cout) layout; stores already lane-dense and the
            # wrapper-side transpose pass is not needed.
            if conv2_by_taps:
                h2 = conv_taps(y, H2, W2, 1, Cout, w2_ref)
            else:
                h2 = jnp.dot(im2col(y, H2, W2, 1, Cout),
                             w2_ref[pl.ds(0, K2), :],
                             preferred_element_type=jnp.float32)
            if has_projection:
                # 1x1 projection fused as one more accumulate (rows K2:).
                h2 = h2 + jnp.dot(xin, w2_ref[pl.ds(K2, Cin), :],
                                  preferred_element_type=jnp.float32)
            else:
                h2 = h2 + xin.astype(jnp.float32)   # identity skip: no MXU work
            out_ref[0] = lrelu(h2 + b2_ref[...]).astype(out_ref.dtype)

    return kernel


def _per_elem_vmem_bytes(H, W, Cin, Cout, k, p, H1, W1, H2, W2):
    """Per-batch-element live-set estimate (bytes) inside the kernel."""
    K1, K2 = k * k * Cin, k * k * Cout
    b = 0
    b += 2 * (2 * H * W * Cin)                      # x tile, bf16, double-buffered
    b += 2 * (H + 2 * p) * (W + 2 * p) * Cin        # padded x (bf16)
    b += 2 * H1 * W1 * K1                           # conv1 slab / taps (bf16)
    b += 4 * H1 * W1 * Cout                         # conv1 output (f32)
    b += 2 * (H1 + 2 * p) * (W1 + 2 * p) * Cout     # re-padded conv1 out (bf16)
    b += 2 * H2 * W2 * (K2 + Cin)                   # conv2 slab + fused residual
    b += 4 * H2 * W2 * Cout                         # conv2 accumulator (f32)
    b += 2 * (4 * H2 * W2 * Cout)                   # out tile, f32, double-buffered
    return b


def _pick_batch_tile(N, per_elem_bytes, weight_bytes):
    """Generation-aware batch tile + VMEM limit from the real live set."""
    try:
        vmem_cap = int(pltpu.get_tpu_info().vmem_capacity_bytes)
    except Exception:                               # pragma: no cover
        vmem_cap = 64 * 1024 * 1024                 # conservative (v7x-sized)
    # 128 MiB parts (v5e/v6e): raise the pipeline limit to ~96 MiB;
    # 64 MiB parts (v7x): 48 MiB with headroom.
    vmem_limit = min(vmem_cap * 3 // 4, 112 * 1024 * 1024)
    budget = min(int(vmem_cap * 0.65), vmem_limit) - weight_bytes - (2 << 20)
    nb = max(1, min(N, budget // max(per_elem_bytes, 1)))
    # v7x shards "parallel" grid axes over 2 TensorCores: keep >= 2 grid steps
    # so both cores get work.
    if vmem_cap <= 64 * 1024 * 1024 and N >= 2:
        nb = min(nb, max(1, N // 2))
    while N % nb:
        nb -= 1
    return nb, vmem_limit


def res_block_forward(x, params, *, kernel_size, stride=1, dilation=1,
                      padding=1, batch_tile=None):
    """x: (N, H, W, Cin) float32 NHWC.  Returns (N, H2, W2, Cout) NHWC."""
    N, H, W, Cin = x.shape
    k, s, d, p = kernel_size, stride, dilation, padding
    w1, b1, w2, b2 = params["w1"], params["b1"], params["w2"], params["b2"]
    Cout = w1.shape[-1]
    has_projection = "wp" in params
    assert has_projection or Cin == Cout

    H1 = (H + 2 * p - d * (k - 1) - 1) // s + 1
    W1 = (W + 2 * p - d * (k - 1) - 1) // s + 1
    H2 = H1 + 2 * p - d * (k - 1)
    W2 = W1 + 2 * p - d * (k - 1)
    if has_projection:
        Hr, Wr = (H - 1) // s + 1, (W - 1) // s + 1
    else:
        Hr, Wr = H, W
    assert (Hr, Wr) == (H2, W2), "residual / conv2 output shapes must match"

    K1, K2 = k * k * Cin, k * k * Cout
    transposed_out = Cout < _LANE       # lane-dense stores for small Cout

    # ---- weight / bias repacking (bf16 at the MXU boundary, f32 biases) ----
    w1_2d = w1.reshape(K1, Cout).astype(jnp.bfloat16)
    b1_row = b1.reshape(1, Cout).astype(jnp.float32)
    bias = b2.astype(jnp.float32)
    if has_projection:
        bias = bias + params["bp"].astype(jnp.float32)   # fold bp into one bias
    w2_2d = w2.reshape(K2, Cout)
    if transposed_out:
        # (Cout, K2 + Cin): conv2 and residual fused into a single dot.
        rcols = (jnp.transpose(params["wp"]) if has_projection
                 else jnp.eye(Cout, Cin, dtype=w2_2d.dtype))
        w2_pack = jnp.concatenate([jnp.transpose(w2_2d), rcols],
                                  axis=1).astype(jnp.bfloat16)
        b2_pack = bias.reshape(Cout, 1)
    else:
        if has_projection:
            w2_pack = jnp.concatenate([w2_2d, params["wp"]],
                                      axis=0).astype(jnp.bfloat16)
        else:
            w2_pack = w2_2d.astype(jnp.bfloat16)
        b2_pack = bias.reshape(1, Cout)

    # Single wrapper pass over x: cast to bf16 (the conv1 zero-pad happens
    # in-kernel, so the kernel DMAs the unpadded, half-width activation).
    x_bf = x.astype(jnp.bfloat16)

    weight_bytes = ((w1_2d.size + w2_pack.size) * 2
                    + (b1_row.size + b2_pack.size) * 4)
    per_elem = _per_elem_vmem_bytes(H, W, Cin, Cout, k, p, H1, W1, H2, W2)
    nb_auto, vmem_limit = _pick_batch_tile(N, per_elem, weight_bytes)
    nb = batch_tile or nb_auto
    assert N % nb == 0
    num_tiles = N // nb
    M2 = nb * H2 * W2

    kernel = _make_resblock_kernel(
        Nb=nb, Cin=Cin, Cout=Cout, k=k, s=s, d=d, p=p, H=H, W=W,
        H1=H1, W1=W1, H2=H2, W2=W2, Hr=Hr, Wr=Wr,
        transposed_out=transposed_out, has_projection=has_projection)

    in_specs = [
        pl.BlockSpec((nb, H, W, Cin), lambda t: (t, 0, 0, 0)),
        pl.BlockSpec(w1_2d.shape, lambda t: (0, 0)),
        pl.BlockSpec(b1_row.shape, lambda t: (0, 0)),
        pl.BlockSpec(w2_pack.shape, lambda t: (0, 0)),
        pl.BlockSpec(b2_pack.shape, lambda t: (0, 0)),
    ]
    if transposed_out:
        out_shape = jax.ShapeDtypeStruct((num_tiles, Cout, M2), x.dtype)
        out_spec = pl.BlockSpec((1, Cout, M2), lambda t: (t, 0, 0))
    else:
        out_shape = jax.ShapeDtypeStruct((num_tiles, M2, Cout), x.dtype)
        out_spec = pl.BlockSpec((1, M2, Cout), lambda t: (t, 0, 0))

    res_k = Cin if (transposed_out or has_projection) else 0
    flops = 2 * N * (H1 * W1 * K1 * Cout + H2 * W2 * (K2 + res_k) * Cout)
    bytes_accessed = (x_bf.size * 2 + N * H2 * W2 * Cout * 4
                      + (w1_2d.size + w2_pack.size) * 2
                      + (b1_row.size + b2_pack.size) * 4)
    cost = pl.CostEstimate(flops=int(flops), transcendentals=0,
                           bytes_accessed=int(bytes_accessed))

    out = pl.pallas_call(
        kernel,
        out_shape=out_shape,
        grid_spec=pltpu.PrefetchScalarGridSpec(
            num_scalar_prefetch=0,
            grid=(num_tiles,),
            in_specs=in_specs,
            out_specs=out_spec),
        compiler_params=pltpu.CompilerParams(
            dimension_semantics=("parallel",),
            vmem_limit_bytes=int(vmem_limit)),
        cost_estimate=cost,
    )(x_bf, w1_2d, b1_row, w2_pack, b2_pack)

    if transposed_out:
        # (num_tiles, Cout, nb*H2*W2) -> (N, H2, W2, Cout): layout plumbing.
        out = out.reshape(num_tiles, Cout, nb, H2, W2)
        out = jnp.transpose(out, (0, 2, 3, 4, 1))
    return out.reshape(N, H2, W2, Cout)


# --------------------------- pure-JAX reference ---------------------------

def _conv2d_ref(x, w, b, stride, padding, dilation):
    out = lax.conv_general_dilated(
        x, w, window_strides=(stride, stride),
        padding=((padding, padding), (padding, padding)),
        rhs_dilation=(dilation, dilation),
        dimension_numbers=("NHWC", "HWIO", "NHWC"),
        precision=lax.Precision.HIGHEST)
    return out + b.reshape(1, 1, 1, -1)


def res_block_ref(x, params, *, kernel_size, stride=1, dilation=1, padding=1):
    out = _conv2d_ref(x, params["w1"], params["b1"], stride, padding, dilation)
    out = jnp.where(out > 0, out, 0.2 * out)
    out = _conv2d_ref(out, params["w2"], params["b2"], 1, padding, dilation)
    if "wp" in params:
        cin, cout = params["wp"].shape
        residual = _conv2d_ref(x, params["wp"].reshape(1, 1, cin, cout),
                               params["bp"], stride, 0, 1)
    else:
        residual = x
    out = out + residual
    return jnp.where(out > 0, out, 0.2 * out)


def init_params(key, Cin, Cout, k, has_projection):
    keys = jax.random.split(key, 6)
    s1 = 1.0 / (k * (Cin ** 0.5))      # fan-in scaling keeps activations O(1)
    s2 = 1.0 / (k * (Cout ** 0.5))
    params = {
        "w1": s1 * jax.random.normal(keys[0], (k, k, Cin, Cout), jnp.float32),
        "b1": 0.1 * jax.random.normal(keys[1], (Cout,), jnp.float32),
        "w2": s2 * jax.random.normal(keys[2], (k, k, Cout, Cout), jnp.float32),
        "b2": 0.1 * jax.random.normal(keys[3], (Cout,), jnp.float32),
    }
    if has_projection:
        sp = 1.0 / (Cin ** 0.5)
        params["wp"] = sp * jax.random.normal(keys[4], (Cin, Cout), jnp.float32)
        params["bp"] = 0.1 * jax.random.normal(keys[5], (Cout,), jnp.float32)
    return params


def _check(x, params, name, **kw):
    out = jax.block_until_ready(res_block_forward(x, params, **kw))
    ref = res_block_ref(x, params, **kw)
    assert out.shape == ref.shape, (name, out.shape, ref.shape)
    err = float(jnp.max(jnp.abs(out - ref)))
    # bf16 MXU operands (f32 accumulation) vs. the HIGHEST-precision f32
    # reference -> loosened tolerance.
    assert jnp.allclose(out, ref, atol=5e-2, rtol=5e-2), (name, err)


if __name__ == "__main__":
    key = jax.random.PRNGKey(0)
    kx, k1, k2, k3, k4, kx2 = jax.random.split(key, 6)

    # Small ResBlock-shaped examples (activations NHWC).
    x = jax.random.normal(kx, (2, 16, 16, 4), jnp.float32)

    # 1) channels_in == channels_out (small) -> transposed layout,
    #    identity skip fused into the single conv2 dot.
    _check(x, init_params(k1, 4, 4, 3, has_projection=False), "identity_small",
           kernel_size=3, stride=1, dilation=1, padding=1)

    # 2) channels_in != channels_out (small) -> 1x1 projection fused into conv2.
    _check(x, init_params(k2, 4, 8, 3, has_projection=True), "projection_small",
           kernel_size=3, stride=1, dilation=1, padding=1)

    # 3) wide channels (>=128): per-tap MXU accumulation + (M, Cout) layout,
    #    identity skip added directly (no eye matmul, no wrapper transpose).
    xw = jax.random.normal(kx2, (2, 16, 16, 128), jnp.float32)
    _check(xw, init_params(k3, 128, 128, 3, has_projection=False),
           "identity_wide", kernel_size=3, stride=1, dilation=1, padding=1)

    # 4) wide Cout with a 1x1 projection (direct layout + fused projection dot).
    xm = jax.random.normal(k4, (2, 8, 8, 32), jnp.float32)
    _check(xm, init_params(jax.random.fold_in(k4, 1), 32, 128, 3,
                           has_projection=True),
           "projection_wide", kernel_size=3, stride=1, dilation=1, padding=1)

    print("KERNEL_OK")
</pallas_src>

<mosaic_0001>
module attributes {stable_mosaic.version = 11 : i64} {
  func.func @kernel(%arg0: i32, %arg1: memref<1x16x16x4xbf16, #tpu.memory_space<vmem>>, %arg2: memref<36x4xbf16, #tpu.memory_space<vmem>>, %arg3: memref<1x4xf32, #tpu.memory_space<vmem>>, %arg4: memref<4x40xbf16, #tpu.memory_space<vmem>>, %arg5: memref<4x1xf32, #tpu.memory_space<vmem>>, %arg6: memref<1x4x256xf32, #tpu.memory_space<vmem>>) attributes {dimension_semantics = [#tpu.dimension_semantics<parallel>], iteration_bounds = array<i64: 2>, scalar_prefetch = 0 : i64, scratch_operands = 0 : i64, tpu.core_type = #tpu.core_type<tc>, window_params = [{transform_indices = @transform_0, window_bounds = array<i64: 1, 16, 16, 4>}, {pipeline_mode = #tpu.pipeline_mode<synchronous>, transform_indices = @transform_1, window_bounds = array<i64: 36, 4>}, {pipeline_mode = #tpu.pipeline_mode<synchronous>, transform_indices = @transform_2, window_bounds = array<i64: 1, 4>}, {pipeline_mode = #tpu.pipeline_mode<synchronous>, transform_indices = @transform_3, window_bounds = array<i64: 4, 40>}, {pipeline_mode = #tpu.pipeline_mode<synchronous>, transform_indices = @transform_4, window_bounds = array<i64: 4, 1>}, {transform_indices = @transform_5, window_bounds = array<i64: 1, 4, 256>}]} {
    %c0 = arith.constant 0 : index
    %c0_0 = arith.constant 0 : index
    %c0_1 = arith.constant 0 : index
    %c0_2 = arith.constant 0 : index
    %0 = vector.load %arg1[%c0, %c0_0, %c0_1, %c0_2] : memref<1x16x16x4xbf16, #tpu.memory_space<vmem>>, vector<1x16x16x4xbf16>
    %cst = arith.constant 0.000000e+00 : bf16
    %1 = vector.broadcast %cst : bf16 to vector<1x1x16x4xbf16>
    %2 = tpu.concatenate %1, %0, %1 in 1 : vector<1x1x16x4xbf16>, vector<1x16x16x4xbf16>, vector<1x1x16x4xbf16> -> vector<1x18x16x4xbf16>
    %cst_3 = arith.constant 0.000000e+00 : bf16
    %3 = vector.broadcast %cst_3 : bf16 to vector<1x18x1x4xbf16>
    %4 = tpu.concatenate %3, %2, %3 in 2 : vector<1x18x1x4xbf16>, vector<1x18x16x4xbf16>, vector<1x18x1x4xbf16> -> vector<1x18x18x4xbf16>
    %5 = vector.extract_strided_slice %4 {offsets = [0, 0, 0, 0], sizes = [1, 16, 16, 4], strides = [1, 1, 1, 1]} : vector<1x18x18x4xbf16> to vector<1x16x16x4xbf16>
    %6 = vector.extract_strided_slice %4 {offsets = [0, 0, 1, 0], sizes = [1, 16, 16, 4], strides = [1, 1, 1, 1]} : vector<1x18x18x4xbf16> to vector<1x16x16x4xbf16>
    %7 = vector.extract_strided_slice %4 {offsets = [0, 0, 2, 0], sizes = [1, 16, 16, 4], strides = [1, 1, 1, 1]} : vector<1x18x18x4xbf16> to vector<1x16x16x4xbf16>
    %8 = vector.extract_strided_slice %4 {offsets = [0, 1, 0, 0], sizes = [1, 16, 16, 4], strides = [1, 1, 1, 1]} : vector<1x18x18x4xbf16> to vector<1x16x16x4xbf16>
    %9 = vector.extract_strided_slice %4 {offsets = [0, 1, 1, 0], sizes = [1, 16, 16, 4], strides = [1, 1, 1, 1]} : vector<1x18x18x4xbf16> to vector<1x16x16x4xbf16>
    %10 = vector.extract_strided_slice %4 {offsets = [0, 1, 2, 0], sizes = [1, 16, 16, 4], strides = [1, 1, 1, 1]} : vector<1x18x18x4xbf16> to vector<1x16x16x4xbf16>
    %11 = vector.extract_strided_slice %4 {offsets = [0, 2, 0, 0], sizes = [1, 16, 16, 4], strides = [1, 1, 1, 1]} : vector<1x18x18x4xbf16> to vector<1x16x16x4xbf16>
    %12 = vector.extract_strided_slice %4 {offsets = [0, 2, 1, 0], sizes = [1, 16, 16, 4], strides = [1, 1, 1, 1]} : vector<1x18x18x4xbf16> to vector<1x16x16x4xbf16>
    %13 = vector.extract_strided_slice %4 {offsets = [0, 2, 2, 0], sizes = [1, 16, 16, 4], strides = [1, 1, 1, 1]} : vector<1x18x18x4xbf16> to vector<1x16x16x4xbf16>
    %14 = tpu.concatenate %5, %6, %7, %8, %9, %10, %11, %12, %13 in 3 : vector<1x16x16x4xbf16>, vector<1x16x16x4xbf16>, vector<1x16x16x4xbf16>, vector<1x16x16x4xbf16>, vector<1x16x16x4xbf16>, vector<1x16x16x4xbf16>, vector<1x16x16x4xbf16>, vector<1x16x16x4xbf16>, vector<1x16x16x4xbf16> -> vector<1x16x16x36xbf16>
    %15 = vector.shape_cast %14 : vector<1x16x16x36xbf16> to vector<256x36xbf16>
    %c0_4 = arith.constant 0 : index
    %c0_5 = arith.constant 0 : index
    %16 = vector.load %arg2[%c0_4, %c0_5] : memref<36x4xbf16, #tpu.memory_space<vmem>>, vector<36x4xbf16>
    %cst_6 = arith.constant dense<0.000000e+00> : vector<256x4xf32>
    %17 = tpu.matmul %15, %16, %cst_6 {dimension_numbers = #tpu.dot_dimension_numbers<[1], [0], [0], [1], [0, 0, 1, 1], [], []>} : vector<256x36xbf16>, vector<36x4xbf16>, vector<256x4xf32> -> vector<256x4xf32>
    %c0_7 = arith.constant 0 : index
    %c0_8 = arith.constant 0 : index
    %18 = vector.load %arg3[%c0_7, %c0_8] : memref<1x4xf32, #tpu.memory_space<vmem>>, vector<1x4xf32>
    %19 = vector.broadcast %18 : vector<1x4xf32> to vector<256x4xf32>
    %20 = arith.addf %17, %19 : vector<256x4xf32>
    %cst_9 = arith.constant 0.000000e+00 : f32
    %21 = vector.broadcast %cst_9 : f32 to vector<256x4xf32>
    %22 = arith.cmpf ogt, %20, %21 : vector<256x4xf32>
    %cst_10 = arith.constant 2.000000e-01 : f32
    %23 = vector.broadcast %cst_10 : f32 to vector<256x4xf32>
    %24 = arith.mulf %23, %20 : vector<256x4xf32>
    %25 = arith.select %22, %20, %24 : vector<256x4xi1>, vector<256x4xf32>
    %26 = arith.truncf %25 : vector<256x4xf32> to vector<256x4xbf16>
    %27 = vector.shape_cast %26 : vector<256x4xbf16> to vector<1x16x16x4xbf16>
    %cst_11 = arith.constant 0.000000e+00 : bf16
    %28 = vector.broadcast %cst_11 : bf16 to vector<1x1x16x4xbf16>
    %29 = tpu.concatenate %28, %27, %28 in 1 : vector<1x1x16x4xbf16>, vector<1x16x16x4xbf16>, vector<1x1x16x4xbf16> -> vector<1x18x16x4xbf16>
    %cst_12 = arith.constant 0.000000e+00 : bf16
    %30 = vector.broadcast %cst_12 : bf16 to vector<1x18x1x4xbf16>
    %31 = tpu.concatenate %30, %29, %30 in 2 : vector<1x18x1x4xbf16>, vector<1x18x16x4xbf16>, vector<1x18x1x4xbf16> -> vector<1x18x18x4xbf16>
    %32 = vector.shape_cast %0 : vector<1x16x16x4xbf16> to vector<256x4xbf16>
    %33 = vector.extract_strided_slice %31 {offsets = [0, 0, 0, 0], sizes = [1, 16, 16, 4], strides = [1, 1, 1, 1]} : vector<1x18x18x4xbf16> to vector<1x16x16x4xbf16>
    %34 = vector.extract_strided_slice %31 {offsets = [0, 0, 1, 0], sizes = [1, 16, 16, 4], strides = [1, 1, 1, 1]} : vector<1x18x18x4xbf16> to vector<1x16x16x4xbf16>
    %35 = vector.extract_strided_slice %31 {offsets = [0, 0, 2, 0], sizes = [1, 16, 16, 4], strides = [1, 1, 1, 1]} : vector<1x18x18x4xbf16> to vector<1x16x16x4xbf16>
    %36 = vector.extract_strided_slice %31 {offsets = [0, 1, 0, 0], sizes = [1, 16, 16, 4], strides = [1, 1, 1, 1]} : vector<1x18x18x4xbf16> to vector<1x16x16x4xbf16>
    %37 = vector.extract_strided_slice %31 {offsets = [0, 1, 1, 0], sizes = [1, 16, 16, 4], strides = [1, 1, 1, 1]} : vector<1x18x18x4xbf16> to vector<1x16x16x4xbf16>
    %38 = vector.extract_strided_slice %31 {offsets = [0, 1, 2, 0], sizes = [1, 16, 16, 4], strides = [1, 1, 1, 1]} : vector<1x18x18x4xbf16> to vector<1x16x16x4xbf16>
    %39 = vector.extract_strided_slice %31 {offsets = [0, 2, 0, 0], sizes = [1, 16, 16, 4], strides = [1, 1, 1, 1]} : vector<1x18x18x4xbf16> to vector<1x16x16x4xbf16>
    %40 = vector.extract_strided_slice %31 {offsets = [0, 2, 1, 0], sizes = [1, 16, 16, 4], strides = [1, 1, 1, 1]} : vector<1x18x18x4xbf16> to vector<1x16x16x4xbf16>
    %41 = vector.extract_strided_slice %31 {offsets = [0, 2, 2, 0], sizes = [1, 16, 16, 4], strides = [1, 1, 1, 1]} : vector<1x18x18x4xbf16> to vector<1x16x16x4xbf16>
    %42 = tpu.concatenate %33, %34, %35, %36, %37, %38, %39, %40, %41 in 3 : vector<1x16x16x4xbf16>, vector<1x16x16x4xbf16>, vector<1x16x16x4xbf16>, vector<1x16x16x4xbf16>, vector<1x16x16x4xbf16>, vector<1x16x16x4xbf16>, vector<1x16x16x4xbf16>, vector<1x16x16x4xbf16>, vector<1x16x16x4xbf16> -> vector<1x16x16x36xbf16>
    %43 = vector.shape_cast %42 : vector<1x16x16x36xbf16> to vector<256x36xbf16>
    %44 = tpu.concatenate %43, %32 in 1 : vector<256x36xbf16>, vector<256x4xbf16> -> vector<256x40xbf16>
    %c0_13 = arith.constant 0 : index
    %c0_14 = arith.constant 0 : index
    %45 = vector.load %arg4[%c0_13, %c0_14] : memref<4x40xbf16, #tpu.memory_space<vmem>>, vector<4x40xbf16>
    %cst_15 = arith.constant dense<0.000000e+00> : vector<4x256xf32>
    %46 = tpu.matmul %45, %44, %cst_15 {dimension_numbers = #tpu.dot_dimension_numbers<[1], [1], [0], [0], [0, 0, 1, 0], [], []>} : vector<4x40xbf16>, vector<256x40xbf16>, vector<4x256xf32> -> vector<4x256xf32>
    %c0_16 = arith.constant 0 : index
    %c0_17 = arith.constant 0 : index
    %47 = vector.load %arg5[%c0_16, %c0_17] : memref<4x1xf32, #tpu.memory_space<vmem>>, vector<4x1xf32>
    %48 = vector.broadcast %47 : vector<4x1xf32> to vector<4x256xf32>
    %49 = arith.addf %46, %48 : vector<4x256xf32>
    %cst_18 = arith.constant 0.000000e+00 : f32
    %50 = vector.broadcast %cst_18 : f32 to vector<4x256xf32>
    %51 = arith.cmpf ogt, %49, %50 : vector<4x256xf32>
    %cst_19 = arith.constant 2.000000e-01 : f32
    %52 = vector.broadcast %cst_19 : f32 to vector<4x256xf32>
    %53 = arith.mulf %52, %49 : vector<4x256xf32>
    %54 = arith.select %51, %49, %53 : vector<4x256xi1>, vector<4x256xf32>
    %c0_20 = arith.constant 0 : index
    %c0_21 = arith.constant 0 : index
    %c0_22 = arith.constant 0 : index
    %55 = vector.load %arg6[%c0_20, %c0_21, %c0_22] : memref<1x4x256xf32, #tpu.memory_space<vmem>>, vector<1x4x256xf32>
    %56 = vector.shape_cast %55 : vector<1x4x256xf32> to vector<4x256xf32>
    %57 = vector.shape_cast %54 : vector<4x256xf32> to vector<1x4x256xf32>
    tpu.vector_store %arg6[%c0_20, %c0_21, %c0_22], %57 {strides = array<i32>} : memref<1x4x256xf32, #tpu.memory_space<vmem>>, vector<1x4x256xf32>,
    return
  }
  func.func @transform_0(%arg0: i32) -> (i32, i32, i32, i32) {
    %c0_i32 = arith.constant 0 : i32
    %c0_i32_0 = arith.constant 0 : i32
    %c0_i32_1 = arith.constant 0 : i32
    %c0_i32_2 = arith.constant 0 : i32
    return %arg0, %c0_i32, %c0_i32_0, %c0_i32_1 : i32, i32, i32, i32
  }
  func.func @transform_1(%arg0: i32) -> (i32, i32) {
    %c0_i32 = arith.constant 0 : i32
    %c0_i32_0 = arith.constant 0 : i32
    %c0_i32_1 = arith.constant 0 : i32
    return %c0_i32, %c0_i32_0 : i32, i32
  }
  func.func @transform_2(%arg0: i32) -> (i32, i32) {
    %c0_i32 = arith.constant 0 : i32
    %c0_i32_0 = arith.constant 0 : i32
    %c0_i32_1 = arith.constant 0 : i32
    return %c0_i32, %c0_i32_0 : i32, i32
  }
  func.func @transform_3(%arg0: i32) -> (i32, i32) {
    %c0_i32 = arith.constant 0 : i32
    %c0_i32_0 = arith.constant 0 : i32
    %c0_i32_1 = arith.constant 0 : i32
    return %c0_i32, %c0_i32_0 : i32, i32
  }
  func.func @transform_4(%arg0: i32) -> (i32, i32) {
    %c0_i32 = arith.constant 0 : i32
    %c0_i32_0 = arith.constant 0 : i32
    %c0_i32_1 = arith.constant 0 : i32
    return %c0_i32, %c0_i32_0 : i32, i32
  }
  func.func @transform_5(%arg0: i32) -> (i32, i32, i32) {
    %c0_i32 = arith.constant 0 : i32
    %c0_i32_0 = arith.constant 0 : i32
    %c0_i32_1 = arith.constant 0 : i32
    return %arg0, %c0_i32, %c0_i32_0 : i32, i32, i32
  }
}

</mosaic_0001>

<llo_original>
// kernel: tpu_custom_call.1
$region0: #{tpu_custom_call.1}
  #allocation0 [shape = 'u32[]', space=smem, size = 0x4, offset = 0x4, fixed_abs, tag = 'smem constant byte address 0x4 - core index']
  #allocation1 [shape = 'u32[144,128]{1,0:T(1,128)}', space=vmem, size = 0x12000, scoped, tag = 'internal scratch']
  %s0 = inlined_call_operand.vmem [shape: bf16[2,16,16,4], index: 0, kind: input, shape index: {}]
  %s1 = inlined_call_operand.vmem [shape: bf16[36,4], index: 1, kind: input, shape index: {}]
  %s2 = inlined_call_operand.vmem [shape: f32[1,4], index: 2, kind: input, shape index: {}]
  %s3 = inlined_call_operand.vmem [shape: bf16[4,40], index: 3, kind: input, shape index: {}]
  %s4 = inlined_call_operand.vmem [shape: f32[4,1], index: 4, kind: input, shape index: {}]
  %s5 = inlined_call_operand.hbm [shape: f32[2,4,256], index: 5, kind: output, shape index: {}]
  %s6 = sld [smem:[#allocation0]]
  $region53: #{tpu_custom_call.1} parent=0
    _
  %s8 = ssub.s32 1, %s6
  %s9 = scalar_select 0, %s8, %s6
  $region1: #{tpu_custom_call.1} parent=0
    #allocation2 [shape = 'u8[8192]{0}', space=vmem, size = 0x2000, scoped, tag = 'output window, operand 0']
    #allocation3 [shape = 's32[2]{0}', space=sflag, size = 0x8, scoped, tag = 'scoped memory for tpu_custom_call.1']
    %10 = vsyncpa [#allocation3], 0
    %s11 = scalar_lea.sflag [#allocation3], 1
    %12 = vsyncpa %s11, 0
    loop: start=0, step=1, limit=4
    $region2: #{tpu_custom_call.1} parent=1 // loop_pre_header
      _
    $region3: #{tpu_custom_call.1} parent=1 // loop_header
      %s14 = sphi 0, %s18
      %p15 = scmp.ge.s32.totalorder %s14, 4
      %s24 = sphi 0, %s26
      %s27 = sphi 0, %s24
      %s28 = sphi 0, %s27
      %s44 = sphi 0, %s28
      %s48 = sphi 0, %s48
      %s50 = sphi 0, %s48
      %s51 = sphi 0, %s50
      %s65 = sphi 0, %s51
      %s69 = sphi 0, %s69
      %s71 = sphi 0, %s69
      %s72 = sphi 0, %s71
      %s86 = sphi 0, %s72
      %s90 = sphi 0, %s90
      %s92 = sphi 0, %s90
      %s93 = sphi 0, %s92
      %s107 = sphi 0, %s93
      %s111 = sphi 0, %s111
      %s113 = sphi 0, %s111
      %s114 = sphi 0, %s113
      %s128 = sphi 0, %s114
      %s134 = sphi 0, %s136
      %s137 = sphi 0, %s134
      %s138 = sphi 0, %s137
      %s154 = sphi 0, %s138
    $region4: #{tpu_custom_call.1} parent=1 // loop_header_branch
      %17 = sbr.rel (%p15) target = $region8
    $region5: #{tpu_custom_call.1} parent=1 // loop_body
      %s19 = ssub.s32 %s14, 1
      %s20 = ssub.s32 %s14, 2
      %s21 = sadd.s32 %s14, 1
      %s22 = ssub.s32 %s14, %s21
      %p23 = scmp.eq.s32.totalorder %s22, 0
      %s25 = sadd.s32 %s24, 1
      %s26 = scalar_select %p23, %s24, %s25
      %p29 = pneg %p23
      %p30 = scmp.eq.s32.totalorder %s14, 1
      %p31 = por %p29, %p30
      %p32 = scmp.ne.s32.totalorder %s24, %s27
      %p33 = scmp.eq.s32.totalorder %s14, 0
      %p34 = por %p32, %p33
      %p35 = scmp.ne.s32.totalorder %s24, %s27
      %p36 = scmp.eq.s32.totalorder %s19, 1
      %p37 = por %p35, %p36
      %p38 = scmp.ne.s32.totalorder %s27, %s28
      %p39 = scmp.eq.s32.totalorder %s19, 0
      %p40 = por %p38, %p39
      %p41 = scmp.ne.s32.totalorder %s27, %s28
      %p42 = scmp.eq.s32.totalorder %s20, 1
      %p43 = por %p41, %p42
      %p45 = scmp.ne.s32.totalorder %s28, %s44
      %p46 = scmp.eq.s32.totalorder %s20, 0
      %p47 = por %p45, %p46
      %s49 = sadd.s32 %s48, 1
      %p52 = scmp.eq.s32.totalorder %s14, 1
      %p53 = scmp.ne.s32.totalorder %s48, %s50
      %p54 = scmp.eq.s32.totalorder %s14, 0
      %p55 = por %p53, %p54
      %p56 = scmp.ne.s32.totalorder %s48, %s50
      %p57 = scmp.eq.s32.totalorder %s19, 1
      %p58 = por %p56, %p57
      %p59 = scmp.ne.s32.totalorder %s50, %s51
      %p60 = scmp.eq.s32.totalorder %s19, 0
      %p61 = por %p59, %p60
      %p62 = scmp.ne.s32.totalorder %s50, %s51
      %p63 = scmp.eq.s32.totalorder %s20, 1
      %p64 = por %p62, %p63
      %p66 = scmp.ne.s32.totalorder %s51, %s65
      %p67 = scmp.eq.s32.totalorder %s20, 0
      %p68 = por %p66, %p67
      %s70 = sadd.s32 %s69, 1
      %p73 = scmp.eq.s32.totalorder %s14, 1
      %p74 = scmp.ne.s32.totalorder %s69, %s71
      %p75 = scmp.eq.s32.totalorder %s14, 0
      %p76 = por %p74, %p75
      %p77 = scmp.ne.s32.totalorder %s69, %s71
      %p78 = scmp.eq.s32.totalorder %s19, 1
      %p79 = por %p77, %p78
      %p80 = scmp.ne.s32.totalorder %s71, %s72
      %p81 = scmp.eq.s32.totalorder %s19, 0
      %p82 = por %p80, %p81
      %p83 = scmp.ne.s32.totalorder %s71, %s72
      %p84 = scmp.eq.s32.totalorder %s20, 1
      %p85 = por %p83, %p84
      %p87 = scmp.ne.s32.totalorder %s72, %s86
      %p88 = scmp.eq.s32.totalorder %s20, 0
      %p89 = por %p87, %p88
      %s91 = sadd.s32 %s90, 1
      %p94 = scmp.eq.s32.totalorder %s14, 1
      %p95 = scmp.ne.s32.totalorder %s90, %s92
      %p96 = scmp.eq.s32.totalorder %s14, 0
      %p97 = por %p95, %p96
      %p98 = scmp.ne.s32.totalorder %s90, %s92
      %p99 = scmp.eq.s32.totalorder %s19, 1
      %p100 = por %p98, %p99
      %p101 = scmp.ne.s32.totalorder %s92, %s93
      %p102 = scmp.eq.s32.totalorder %s19, 0
      %p103 = por %p101, %p102
      %p104 = scmp.ne.s32.totalorder %s92, %s93
      %p105 = scmp.eq.s32.totalorder %s20, 1
      %p106 = por %p104, %p105
      %p108 = scmp.ne.s32.totalorder %s93, %s107
      %p109 = scmp.eq.s32.totalorder %s20, 0
      %p110 = por %p108, %p109
      %s112 = sadd.s32 %s111, 1
      %p115 = scmp.eq.s32.totalorder %s14, 1
      %p116 = scmp.ne.s32.totalorder %s111, %s113
      %p117 = scmp.eq.s32.totalorder %s14, 0
      %p118 = por %p116, %p117
      %p119 = scmp.ne.s32.totalorder %s111, %s113
      %p120 = scmp.eq.s32.totalorder %s19, 1
      %p121 = por %p119, %p120
      %p122 = scmp.ne.s32.totalorder %s113, %s114
      %p123 = scmp.eq.s32.totalorder %s19, 0
      %p124 = por %p122, %p123
      %p125 = scmp.ne.s32.totalorder %s113, %s114
      %p126 = scmp.eq.s32.totalorder %s20, 1
      %p127 = por %p125, %p126
      %p129 = scmp.ne.s32.totalorder %s114, %s128
      %p130 = scmp.eq.s32.totalorder %s20, 0
      %p131 = por %p129, %p130
      %s132 = ssub.s32 %s14, %s21
      %p133 = scmp.eq.s32.totalorder %s132, 0
      %s135 = sadd.s32 %s134, 1
      %s136 = scalar_select %p133, %s134, %s135
      %p139 = pneg %p133
      %p140 = scmp.eq.s32.totalorder %s14, 1
      %p141 = por %p139, %p140
      %p142 = scmp.ne.s32.totalorder %s134, %s137
      %p143 = scmp.eq.s32.totalorder %s14, 0
      %p144 = por %p142, %p143
      %p145 = scmp.ne.s32.totalorder %s134, %s137
      %p146 = scmp.eq.s32.totalorder %s19, 1
      %p147 = por %p145, %p146
      %p148 = scmp.ne.s32.totalorder %s137, %s138
      %p149 = scmp.eq.s32.totalorder %s19, 0
      %p150 = por %p148, %p149
      %p151 = scmp.ne.s32.totalorder %s137, %s138
      %p152 = scmp.eq.s32.totalorder %s20, 1
      %p153 = por %p151, %p152
      %p155 = scmp.ne.s32.totalorder %s138, %s154
      %p156 = scmp.eq.s32.totalorder %s20, 0
      %p157 = por %p155, %p156
      %p158 = scmp.le.s32.totalorder 1, %s14
      %p159 = scmp.lt.s32.totalorder %s14, 3
      %p160 = pnand %p158, %p159
      %p161 = pneg %p160
      // Predicated region
      $region9: #{tpu_custom_call.1} parent=5 // pred_check
        _
      $region10: #{tpu_custom_call.1} parent=5 // pred_check_branch
        %163 = sbr.rel (%p160) target = $region12
      $region11: #{tpu_custom_call.1} parent=5 // pred_region
        %s164 = ssub.s32 %s14, 1
        // Predicated region
        $region13: #{tpu_custom_call.1} parent=11 // pred_check
          %p165 = pneg %p61
        $region14: #{tpu_custom_call.1} parent=11 // pred_check_branch
          %167 = sbr.rel (%p165) target = $region16
        $region15: #{tpu_custom_call.1} parent=11 // pred_region
          _
        $region16: #{tpu_custom_call.1} parent=11 // pred_fallthru
          _
        // Predicated region
        $region17: #{tpu_custom_call.1} parent=11 // pred_check
          %p168 = pneg %p82
        $region18: #{tpu_custom_call.1} parent=11 // pred_check_branch
          %170 = sbr.rel (%p168) target = $region20
        $region19: #{tpu_custom_call.1} parent=11 // pred_region
          _
        $region20: #{tpu_custom_call.1} parent=11 // pred_fallthru
          _
        // Predicated region
        $region21: #{tpu_custom_call.1} parent=11 // pred_check
          %p171 = pneg %p103
        $region22: #{tpu_custom_call.1} parent=11 // pred_check_branch
          %173 = sbr.rel (%p171) target = $region24
        $region23: #{tpu_custom_call.1} parent=11 // pred_region
          _
        $region24: #{tpu_custom_call.1} parent=11 // pred_fallthru
          _
        // Predicated region
        $region25: #{tpu_custom_call.1} parent=11 // pred_check
          %p174 = pneg %p124
        $region26: #{tpu_custom_call.1} parent=11 // pred_check_branch
          %176 = sbr.rel (%p174) target = $region28
        $region27: #{tpu_custom_call.1} parent=11 // pred_region
          _
        $region28: #{tpu_custom_call.1} parent=11 // pred_fallthru
          _
      $region12: #{tpu_custom_call.1} parent=5 // pred_fallthru
        _
      %p177 = scmp.lt.s32.totalorder %s14, 2
      // Predicated region
      $region29: #{tpu_custom_call.1} parent=5 // pred_check
        %p178 = pneg %p177
      $region30: #{tpu_custom_call.1} parent=5 // pred_check_branch
        %180 = sbr.rel (%p178) target = $region32
      $region31: #{tpu_custom_call.1} parent=5 // pred_region
        // Predicated region
        $region33: #{tpu_custom_call.1} parent=31 // pred_check
          %p181 = pneg %p34
        $region34: #{tpu_custom_call.1} parent=31 // pred_check_branch
          %183 = sbr.rel (%p181) target = $region36
        $region35: #{tpu_custom_call.1} parent=31 // pred_region
          %p184 = scmp.lt.s32.totalorder %s14, 1
          %s185 = scalar_select %p184, %s14, 1
          %s186 = smul.addr %s185, 32
          %s187 = smul.addr %s186, 4
          %s188 = scalar_lea.vmem %s0, %s187
        $region36: #{tpu_custom_call.1} parent=31 // pred_fallthru
          _
      $region32: #{tpu_custom_call.1} parent=5 // pred_fallthru
        _
      %p189 = scmp.le.s32.totalorder 1, %s14
      %p190 = scmp.lt.s32.totalorder %s14, 3
      %p191 = pnand %p189, %p190
      %p192 = pneg %p191
      // Predicated region
      $region37: #{tpu_custom_call.1} parent=5 // pred_check
        _
      $region38: #{tpu_custom_call.1} parent=5 // pred_check_branch
        %194 = sbr.rel (%p191) target = $region40
      $region39: #{tpu_custom_call.1} parent=5 // pred_region
        %s195 = ssub.s32 %s14, 1
        %p196 = scmp.lt.s32.totalorder %s19, 1
        %s197 = scalar_select %p196, %s19, 1
        %s198 = smul.addr %s197, 32
        %s199 = smul.addr %s198, 4
        %s200 = scalar_lea.vmem %s0, %s199
        %p201 = pneg %p40
        %p202 = pneg %p37
        %p203 = pneg %p61
        %p204 = pneg %p58
        %p205 = pneg %p82
        %p206 = pneg %p79
        %p207 = pneg %p103
        %p208 = pneg %p100
        %p209 = pneg %p124
        %p210 = pneg %p121
        %p211 = pneg %p150
        %p212 = pneg %p147
        %s213 = sand.u32 %s137, 1
        %s214 = scalar_lea.sflag [#allocation3], %s213
        %s215 = sand.u32 %s137, 1
        %s216 = smul.addr %s215, 8
        %s217 = scalar_lea.vmem [#allocation2], %s216
        %p218 = scmp.lt.s32.totalorder %s19, 1
        %s219 = scalar_select %p218, %s19, 1
        %s220 = smul.addr %s219, 32
        %s221 = smul.addr %s220, 4
        %s222 = scalar_lea.vmem %s0, %s221
        %v224 = vld [vmem:[%s222] sm:$0xf]
        %v225 = vld [vmem:[%s222 + $0x4] sm:$0xf]
        %v226 = vld [vmem:[%s222 + $0x8] sm:$0xf]
        %v227 = vld [vmem:[%s222 + $0xc] sm:$0xf]
        %v228 = vld [vmem:[%s222 + $0x10] sm:$0xf]
        %v229 = vld [vmem:[%s222 + $0x14] sm:$0xf]
        %v230 = vld [vmem:[%s222 + $0x18] sm:$0xf]
        %v231 = vld [vmem:[%s222 + $0x1c] sm:$0xf]
        %v232 = vld [vmem:[%s222 + $0x20] sm:$0xf]
        %v233 = vld [vmem:[%s222 + $0x24] sm:$0xf]
        %v234 = vld [vmem:[%s222 + $0x28] sm:$0xf]
        %v235 = vld [vmem:[%s222 + $0x2c] sm:$0xf]
        %v236 = vld [vmem:[%s222 + $0x30] sm:$0xf]
        %v237 = vld [vmem:[%s222 + $0x34] sm:$0xf]
        %v238 = vld [vmem:[%s222 + $0x38] sm:$0xf]
        %v239 = vld [vmem:[%s222 + $0x3c] sm:$0xf]
        %v240 = vld [vmem:[%s222 + $0x40] sm:$0xf]
        %v241 = vld [vmem:[%s222 + $0x44] sm:$0xf]
        %v242 = vld [vmem:[%s222 + $0x48] sm:$0xf]
        %v243 = vld [vmem:[%s222 + $0x4c] sm:$0xf]
        %v244 = vld [vmem:[%s222 + $0x50] sm:$0xf]
        %v245 = vld [vmem:[%s222 + $0x54] sm:$0xf]
        %v246 = vld [vmem:[%s222 + $0x58] sm:$0xf]
        %v247 = vld [vmem:[%s222 + $0x5c] sm:$0xf]
        %v248 = vld [vmem:[%s222 + $0x60] sm:$0xf]
        %v249 = vld [vmem:[%s222 + $0x64] sm:$0xf]
        %v250 = vld [vmem:[%s222 + $0x68] sm:$0xf]
        %v251 = vld [vmem:[%s222 + $0x6c] sm:$0xf]
        %v252 = vld [vmem:[%s222 + $0x70] sm:$0xf]
        %v253 = vld [vmem:[%s222 + $0x74] sm:$0xf]
        %v254 = vld [vmem:[%s222 + $0x78] sm:$0xf]
        %v255 = vld [vmem:[%s222 + $0x7c] sm:$0xf]
        %v288 = vunpack.c.l.b16 %v224
        %v289 = vunpack.c.l.b16 %v225
        %v290 = vunpack.c.l.b16 %v226
        %v291 = vunpack.c.l.b16 %v227
        %v292 = vunpack.c.l.b16 %v228
        %v293 = vunpack.c.l.b16 %v229
        %v294 = vunpack.c.l.b16 %v230
        %v295 = vunpack.c.l.b16 %v231
        %v296 = vunpack.c.l.b16 %v232
        %v297 = vunpack.c.l.b16 %v233
        %v298 = vunpack.c.l.b16 %v234
        %v299 = vunpack.c.l.b16 %v235
        %v300 = vunpack.c.l.b16 %v236
        %v301 = vunpack.c.l.b16 %v237
        %v302 = vunpack.c.l.b16 %v238
        %v303 = vunpack.c.l.b16 %v239
        %v304 = vunpack.c.l.b16 %v240
        %v305 = vunpack.c.l.b16 %v241
        %v306 = vunpack.c.l.b16 %v242
        %v307 = vunpack.c.l.b16 %v243
        %v308 = vunpack.c.l.b16 %v244
        %v309 = vunpack.c.l.b16 %v245
        %v310 = vunpack.c.l.b16 %v246
        %v311 = vunpack.c.l.b16 %v247
        %v312 = vunpack.c.l.b16 %v248
        %v313 = vunpack.c.l.b16 %v249
        %v314 = vunpack.c.l.b16 %v250
        %v315 = vunpack.c.l.b16 %v251
        %v316 = vunpack.c.l.b16 %v252
        %v317 = vunpack.c.l.b16 %v253
        %v318 = vunpack.c.l.b16 %v254
        %v319 = vunpack.c.l.b16 %v255
        %v320 = vpack.c.b16 %v289, %v288
        %v321 = vpack.c.b16 %v291, %v290
        %v322 = vpack.c.b16 %v293, %v292
        %v323 = vpack.c.b16 %v295, %v294
        %v324 = vpack.c.b16 %v297, %v296
        %v325 = vpack.c.b16 %v299, %v298
        %v326 = vpack.c.b16 %v301, %v300
        %v327 = vpack.c.b16 %v303, %v302
        %v328 = vpack.c.b16 %v305, %v304
        %v329 = vpack.c.b16 %v307, %v306
        %v330 = vpack.c.b16 %v309, %v308
        %v331 = vpack.c.b16 %v311, %v310
        %v332 = vpack.c.b16 %v313, %v312
        %v333 = vpack.c.b16 %v315, %v314
        %v334 = vpack.c.b16 %v317, %v316
        %v335 = vpack.c.b16 %v319, %v318
        %v337 = vshrl.u32 0, 16
        %v339 = vrot.slane %v337, 7
        %v340 = vshll.u32 0, 16
        %v342 = vor.u32 %v339, %v340
        %v344 = vshrl.u32 %v320, 16
        %v346 = vrot.slane %v344, 7
        %v347 = vshll.u32 %v320, 16
        %v349 = vor.u32 %v346, %v347
        %v351 = vshrl.u32 %v321, 16
        %v353 = vrot.slane %v351, 7
        %v354 = vshll.u32 %v321, 16
        %v356 = vor.u32 %v353, %v354
        %v358 = vshrl.u32 %v322, 16
        %v360 = vrot.slane %v358, 7
        %v361 = vshll.u32 %v322, 16
        %v363 = vor.u32 %v360, %v361
        %v365 = vshrl.u32 %v323, 16
        %v367 = vrot.slane %v365, 7
        %v368 = vshll.u32 %v323, 16
        %v370 = vor.u32 %v367, %v368
        %v372 = vshrl.u32 %v324, 16
        %v374 = vrot.slane %v372, 7
        %v375 = vshll.u32 %v324, 16
        %v377 = vor.u32 %v374, %v375
        %v379 = vshrl.u32 %v325, 16
        %v381 = vrot.slane %v379, 7
        %v382 = vshll.u32 %v325, 16
        %v384 = vor.u32 %v381, %v382
        %v386 = vshrl.u32 %v326, 16
        %v388 = vrot.slane %v386, 7
        %v389 = vshll.u32 %v326, 16
        %v391 = vor.u32 %v388, %v389
        %v393 = vshrl.u32 %v327, 16
        %v395 = vrot.slane %v393, 7
        %v396 = vshll.u32 %v327, 16
        %v398 = vor.u32 %v395, %v396
        %v400 = vshrl.u32 %v328, 16
        %v402 = vrot.slane %v400, 7
        %v403 = vshll.u32 %v328, 16
        %v405 = vor.u32 %v402, %v403
        %v407 = vshrl.u32 %v329, 16
        %v409 = vrot.slane %v407, 7
        %v410 = vshll.u32 %v329, 16
        %v412 = vor.u32 %v409, %v410
        %v414 = vshrl.u32 %v330, 16
        %v416 = vrot.slane %v414, 7
        %v417 = vshll.u32 %v330, 16
        %v419 = vor.u32 %v416, %v417
        %v421 = vshrl.u32 %v331, 16
        %v423 = vrot.slane %v421, 7
        %v424 = vshll.u32 %v331, 16
        %v426 = vor.u32 %v423, %v424
        %v428 = vshrl.u32 %v332, 16
        %v430 = vrot.slane %v428, 7
        %v431 = vshll.u32 %v332, 16
        %v433 = vor.u32 %v430, %v431
        %v435 = vshrl.u32 %v333, 16
        %v437 = vrot.slane %v435, 7
        %v438 = vshll.u32 %v333, 16
        %v440 = vor.u32 %v437, %v438
        %v442 = vshrl.u32 %v334, 16
        %v444 = vrot.slane %v442, 7
        %v445 = vshll.u32 %v334, 16
        %v447 = vor.u32 %v444, %v445
        %v449 = vshrl.u32 %v335, 16
        %v451 = vrot.slane %v449, 7
        %v452 = vshll.u32 %v335, 16
        %v454 = vor.u32 %v451, %v452
        %vm489 = vcmask 1040384
        %vm490 = vsmask.f32 256
        %vm491 = vmand %vm489, %vm490
        %v492 = vsel %vm491, 0, %v342
        %v493 = vsel %vm491, 0, %v349
        %v494 = vsel %vm491, 0, %v356
        %v495 = vsel %vm491, 0, %v363
        %v496 = vsel %vm491, 0, %v370
        %v497 = vsel %vm491, 0, %v377
        %v498 = vsel %vm491, 0, %v384
        %v499 = vsel %vm491, 0, %v391
        %v500 = vsel %vm491, 0, %v398
        %v501 = vsel %vm491, 0, %v405
        %v502 = vsel %vm491, 0, %v412
        %v503 = vsel %vm491, 0, %v419
        %v504 = vsel %vm491, 0, %v426
        %v505 = vsel %vm491, 0, %v433
        %v506 = vsel %vm491, 0, %v440
        %v507 = vsel %vm491, 0, %v447
        %v508 = vsel %vm491, 0, %v454
        %v509 = vsel %vm491, %v339, 0
        %v510 = vsel %vm491, %v346, 0
        %v511 = vsel %vm491, %v353, 0
        %v512 = vsel %vm491, %v360, 0
        %v513 = vsel %vm491, %v367, 0
        %v514 = vsel %vm491, %v374, 0
        %v515 = vsel %vm491, %v381, 0
        %v516 = vsel %vm491, %v388, 0
        %v517 = vsel %vm491, %v395, 0
        %v518 = vsel %vm491, %v402, 0
        %v519 = vsel %vm491, %v409, 0
        %v520 = vsel %vm491, %v416, 0
        %v521 = vsel %vm491, %v423, 0
        %v522 = vsel %vm491, %v430, 0
        %v523 = vsel %vm491, %v437, 0
        %v524 = vsel %vm491, %v444, 0
        %v525 = vsel %vm491, %v451, 0
        %vm526 = vsmask.f32 7424
        %v528 = vshrl.u32 %v492, 16
        %v530 = vshll.u32 %v492, 16
        %v532 = vrot.slane %v530, 1
        %v533 = vor.u32 %v528, %v532
        %v535 = vshll.u32 %v509, 16
        %v537 = vrot.slane %v535, 1
        %v538 = vsel %vm526, %v533, %v537
        %v540 = vshrl.u32 %v493, 16
        %v542 = vshll.u32 %v493, 16
        %v544 = vrot.slane %v542, 1
        %v545 = vor.u32 %v540, %v544
        %v547 = vshll.u32 %v510, 16
        %v549 = vrot.slane %v547, 1
        %v550 = vsel %vm526, %v545, %v549
        %v552 = vshrl.u32 %v494, 16
        %v554 = vshll.u32 %v494, 16
        %v556 = vrot.slane %v554, 1
        %v557 = vor.u32 %v552, %v556
        %v559 = vshll.u32 %v511, 16
        %v561 = vrot.slane %v559, 1
        %v562 = vsel %vm526, %v557, %v561
        %v564 = vshrl.u32 %v495, 16
        %v566 = vshll.u32 %v495, 16
        %v568 = vrot.slane %v566, 1
        %v569 = vor.u32 %v564, %v568
        %v571 = vshll.u32 %v512, 16
        %v573 = vrot.slane %v571, 1
        %v574 = vsel %vm526, %v569, %v573
        %v576 = vshrl.u32 %v496, 16
        %v578 = vshll.u32 %v496, 16
        %v580 = vrot.slane %v578, 1
        %v581 = vor.u32 %v576, %v580
        %v583 = vshll.u32 %v513, 16
        %v585 = vrot.slane %v583, 1
        %v586 = vsel %vm526, %v581, %v585
        %v588 = vshrl.u32 %v497, 16
        %v590 = vshll.u32 %v497, 16
        %v592 = vrot.slane %v590, 1
        %v593 = vor.u32 %v588, %v592
        %v595 = vshll.u32 %v514, 16
        %v597 = vrot.slane %v595, 1
        %v598 = vsel %vm526, %v593, %v597
        %v600 = vshrl.u32 %v498, 16
        %v602 = vshll.u32 %v498, 16
        %v604 = vrot.slane %v602, 1
        %v605 = vor.u32 %v600, %v604
        %v607 = vshll.u32 %v515, 16
        %v609 = vrot.slane %v607, 1
        %v610 = vsel %vm526, %v605, %v609
        %v612 = vshrl.u32 %v499, 16
        %v614 = vshll.u32 %v499, 16
        %v616 = vrot.slane %v614, 1
        %v617 = vor.u32 %v612, %v616
        %v619 = vshll.u32 %v516, 16
        %v621 = vrot.slane %v619, 1
        %v622 = vsel %vm526, %v617, %v621
        %v624 = vshrl.u32 %v500, 16
        %v626 = vshll.u32 %v500, 16
        %v628 = vrot.slane %v626, 1
        %v629 = vor.u32 %v624, %v628
        %v631 = vshll.u32 %v517, 16
        %v633 = vrot.slane %v631, 1
        %v634 = vsel %vm526, %v629, %v633
        %v636 = vshrl.u32 %v501, 16
        %v638 = vshll.u32 %v501, 16
        %v640 = vrot.slane %v638, 1
        %v641 = vor.u32 %v636, %v640
        %v643 = vshll.u32 %v518, 16
        %v645 = vrot.slane %v643, 1
        %v646 = vsel %vm526, %v641, %v645
        %v648 = vshrl.u32 %v502, 16
        %v650 = vshll.u32 %v502, 16
        %v652 = vrot.slane %v650, 1
        %v653 = vor.u32 %v648, %v652
        %v655 = vshll.u32 %v519, 16
        %v657 = vrot.slane %v655, 1
        %v658 = vsel %vm526, %v653, %v657
        %v660 = vshrl.u32 %v503, 16
        %v662 = vshll.u32 %v503, 16
        %v664 = vrot.slane %v662, 1
        %v665 = vor.u32 %v660, %v664
        %v667 = vshll.u32 %v520, 16
        %v669 = vrot.slane %v667, 1
        %v670 = vsel %vm526, %v665, %v669
        %v672 = vshrl.u32 %v504, 16
        %v674 = vshll.u32 %v504, 16
        %v676 = vrot.slane %v674, 1
        %v677 = vor.u32 %v672, %v676
        %v679 = vshll.u32 %v521, 16
        %v681 = vrot.slane %v679, 1
        %v682 = vsel %vm526, %v677, %v681
        %v684 = vshrl.u32 %v505, 16
        %v686 = vshll.u32 %v505, 16
        %v688 = vrot.slane %v686, 1
        %v689 = vor.u32 %v684, %v688
        %v691 = vshll.u32 %v522, 16
        %v693 = vrot.slane %v691, 1
        %v694 = vsel %vm526, %v689, %v693
        %v696 = vshrl.u32 %v506, 16
        %v698 = vshll.u32 %v506, 16
        %v700 = vrot.slane %v698, 1
        %v701 = vor.u32 %v696, %v700
        %v703 = vshll.u32 %v523, 16
        %v705 = vrot.slane %v703, 1
        %v706 = vsel %vm526, %v701, %v705
        %v708 = vshrl.u32 %v507, 16
        %v710 = vshll.u32 %v507, 16
        %v712 = vrot.slane %v710, 1
        %v713 = vor.u32 %v708, %v712
        %v715 = vshll.u32 %v524, 16
        %v717 = vrot.slane %v715, 1
        %v718 = vsel %vm526, %v713, %v717
        %719 = vrot.lane.b32.xlu0 %v538, 4
        %v720 = vpop.permute.xlu0 %719
        %721 = vrot.lane.b32.xlu0 %v550, 4
        %v722 = vpop.permute.xlu0 %721
        %723 = vrot.lane.b32.xlu0 %v562, 4
        %v724 = vpop.permute.xlu0 %723
        %725 = vrot.lane.b32.xlu0 %v574, 4
        %v726 = vpop.permute.xlu0 %725
        %727 = vrot.lane.b32.xlu0 %v586, 4
        %v728 = vpop.permute.xlu0 %727
        %729 = vrot.lane.b32.xlu0 %v598, 4
        %v730 = vpop.permute.xlu0 %729
        %731 = vrot.lane.b32.xlu0 %v610, 4
        %v732 = vpop.permute.xlu0 %731
        %733 = vrot.lane.b32.xlu0 %v622, 4
        %v734 = vpop.permute.xlu0 %733
        %735 = vrot.lane.b32.xlu0 %v634, 4
        %v736 = vpop.permute.xlu0 %735
        %737 = vrot.lane.b32.xlu0 %v646, 4
        %v738 = vpop.permute.xlu0 %737
        %739 = vrot.lane.b32.xlu0 %v658, 4
        %v740 = vpop.permute.xlu0 %739
        %741 = vrot.lane.b32.xlu0 %v670, 4
        %v742 = vpop.permute.xlu0 %741
        %743 = vrot.lane.b32.xlu0 %v682, 4
        %v744 = vpop.permute.xlu0 %743
        %745 = vrot.lane.b32.xlu0 %v694, 4
        %v746 = vpop.permute.xlu0 %745
        %747 = vrot.lane.b32.xlu0 %v706, 4
        %v748 = vpop.permute.xlu0 %747
        %749 = vrot.lane.b32.xlu0 %v718, 4
        %v750 = vpop.permute.xlu0 %749
        %vm783 = vcmask 1046528
        %v784 = vrot.slane %v492, 1
        %v785 = vrot.slane %v509, 1
        %v786 = vsel %vm783, %v784, %v785
        %v787 = vrot.slane %v493, 1
        %v788 = vrot.slane %v510, 1
        %v789 = vsel %vm783, %v787, %v788
        %v790 = vrot.slane %v494, 1
        %v791 = vrot.slane %v511, 1
        %v792 = vsel %vm783, %v790, %v791
        %v793 = vrot.slane %v495, 1
        %v794 = vrot.slane %v512, 1
        %v795 = vsel %vm783, %v793, %v794
        %v796 = vrot.slane %v496, 1
        %v797 = vrot.slane %v513, 1
        %v798 = vsel %vm783, %v796, %v797
        %v799 = vrot.slane %v497, 1
        %v800 = vrot.slane %v514, 1
        %v801 = vsel %vm783, %v799, %v800
        %v802 = vrot.slane %v498, 1
        %v803 = vrot.slane %v515, 1
        %v804 = vsel %vm783, %v802, %v803
        %v805 = vrot.slane %v499, 1
        %v806 = vrot.slane %v516, 1
        %v807 = vsel %vm783, %v805, %v806
        %v808 = vrot.slane %v500, 1
        %v809 = vrot.slane %v517, 1
        %v810 = vsel %vm783, %v808, %v809
        %v811 = vrot.slane %v501, 1
        %v812 = vrot.slane %v518, 1
        %v813 = vsel %vm783, %v811, %v812
        %v814 = vrot.slane %v502, 1
        %v815 = vrot.slane %v519, 1
        %v816 = vsel %vm783, %v814, %v815
        %v817 = vrot.slane %v503, 1
        %v818 = vrot.slane %v520, 1
        %v819 = vsel %vm783, %v817, %v818
        %v820 = vrot.slane %v504, 1
        %v821 = vrot.slane %v521, 1
        %v822 = vsel %vm783, %v820, %v821
        %v823 = vrot.slane %v505, 1
        %v824 = vrot.slane %v522, 1
        %v825 = vsel %vm783, %v823, %v824
        %v826 = vrot.slane %v506, 1
        %v827 = vrot.slane %v523, 1
        %v828 = vsel %vm783, %v826, %v827
        %v829 = vrot.slane %v507, 1
        %v830 = vrot.slane %v524, 1
        %v831 = vsel %vm783, %v829, %v830
        %832 = vrot.lane.b32.xlu0 %v786, 8
        %v833 = vpop.permute.xlu0 %832
        %834 = vrot.lane.b32.xlu0 %v789, 8
        %v835 = vpop.permute.xlu0 %834
        %836 = vrot.lane.b32.xlu0 %v792, 8
        %v837 = vpop.permute.xlu0 %836
        %838 = vrot.lane.b32.xlu0 %v795, 8
        %v839 = vpop.permute.xlu0 %838
        %840 = vrot.lane.b32.xlu0 %v798, 8
        %v841 = vpop.permute.xlu0 %840
        %842 = vrot.lane.b32.xlu0 %v801, 8
        %v843 = vpop.permute.xlu0 %842
        %844 = vrot.lane.b32.xlu0 %v804, 8
        %v845 = vpop.permute.xlu0 %844
        %846 = vrot.lane.b32.xlu0 %v807, 8
        %v847 = vpop.permute.xlu0 %846
        %848 = vrot.lane.b32.xlu0 %v810, 8
        %v849 = vpop.permute.xlu0 %848
        %850 = vrot.lane.b32.xlu0 %v813, 8
        %v851 = vpop.permute.xlu0 %850
        %852 = vrot.lane.b32.xlu0 %v816, 8
        %v853 = vpop.permute.xlu0 %852
        %854 = vrot.lane.b32.xlu0 %v819, 8
        %v855 = vpop.permute.xlu0 %854
        %856 = vrot.lane.b32.xlu0 %v822, 8
        %v857 = vpop.permute.xlu0 %856
        %858 = vrot.lane.b32.xlu0 %v825, 8
        %v859 = vpop.permute.xlu0 %858
        %860 = vrot.lane.b32.xlu0 %v828, 8
        %v861 = vpop.permute.xlu0 %860
        %862 = vrot.lane.b32.xlu0 %v831, 8
        %v863 = vpop.permute.xlu0 %862
        %865 = vrot.lane.b32.xlu0 %v493, 12
        %v866 = vpop.permute.xlu0 %865
        %867 = vrot.lane.b32.xlu0 %v494, 12
        %v868 = vpop.permute.xlu0 %867
        %869 = vrot.lane.b32.xlu0 %v495, 12
        %v870 = vpop.permute.xlu0 %869
        %871 = vrot.lane.b32.xlu0 %v496, 12
        %v872 = vpop.permute.xlu0 %871
        %873 = vrot.lane.b32.xlu0 %v497, 12
        %v874 = vpop.permute.xlu0 %873
        %875 = vrot.lane.b32.xlu0 %v498, 12
        %v876 = vpop.permute.xlu0 %875
        %877 = vrot.lane.b32.xlu0 %v499, 12
        %v878 = vpop.permute.xlu0 %877
        %879 = vrot.lane.b32.xlu0 %v500, 12
        %v880 = vpop.permute.xlu0 %879
        %881 = vrot.lane.b32.xlu0 %v501, 12
        %v882 = vpop.permute.xlu0 %881
        %883 = vrot.lane.b32.xlu0 %v502, 12
        %v884 = vpop.permute.xlu0 %883
        %885 = vrot.lane.b32.xlu0 %v503, 12
        %v886 = vpop.permute.xlu0 %885
        %887 = vrot.lane.b32.xlu0 %v504, 12
        %v888 = vpop.permute.xlu0 %887
        %889 = vrot.lane.b32.xlu0 %v505, 12
        %v890 = vpop.permute.xlu0 %889
        %891 = vrot.lane.b32.xlu0 %v506, 12
        %v892 = vpop.permute.xlu0 %891
        %893 = vrot.lane.b32.xlu0 %v507, 12
        %v894 = vpop.permute.xlu0 %893
        %895 = vrot.lane.b32.xlu0 %v508, 12
        %v896 = vpop.permute.xlu0 %895
        %v898 = vshrl.u32 %v508, 16
        %v900 = vshll.u32 %v508, 16
        %v902 = vrot.slane %v900, 1
        %v903 = vor.u32 %v898, %v902
        %v905 = vshll.u32 %v525, 16
        %v907 = vrot.slane %v905, 1
        %v908 = vsel %vm526, %v903, %v907
        %909 = vrot.lane.b32.xlu0 %v550, 16
        %v910 = vpop.permute.xlu0 %909
        %911 = vrot.lane.b32.xlu0 %v562, 16
        %v912 = vpop.permute.xlu0 %911
        %913 = vrot.lane.b32.xlu0 %v574, 16
        %v914 = vpop.permute.xlu0 %913
        %915 = vrot.lane.b32.xlu0 %v586, 16
        %v916 = vpop.permute.xlu0 %915
        %917 = vrot.lane.b32.xlu0 %v598, 16
        %v918 = vpop.permute.xlu0 %917
        %919 = vrot.lane.b32.xlu0 %v610, 16
        %v920 = vpop.permute.xlu0 %919
        %921 = vrot.lane.b32.xlu0 %v622, 16
        %v922 = vpop.permute.xlu0 %921
        %923 = vrot.lane.b32.xlu0 %v634, 16
        %v924 = vpop.permute.xlu0 %923
        %925 = vrot.lane.b32.xlu0 %v646, 16
        %v926 = vpop.permute.xlu0 %925
        %927 = vrot.lane.b32.xlu0 %v658, 16
        %v928 = vpop.permute.xlu0 %927
        %929 = vrot.lane.b32.xlu0 %v670, 16
        %v930 = vpop.permute.xlu0 %929
        %931 = vrot.lane.b32.xlu0 %v682, 16
        %v932 = vpop.permute.xlu0 %931
        %933 = vrot.lane.b32.xlu0 %v694, 16
        %v934 = vpop.permute.xlu0 %933
        %935 = vrot.lane.b32.xlu0 %v706, 16
        %v936 = vpop.permute.xlu0 %935
        %937 = vrot.lane.b32.xlu0 %v718, 16
        %v938 = vpop.permute.xlu0 %937
        %939 = vrot.lane.b32.xlu0 %v908, 16
        %v940 = vpop.permute.xlu0 %939
        %v942 = vrot.slane %v508, 1
        %v943 = vrot.slane %v525, 1
        %v944 = vsel %vm783, %v942, %v943
        %945 = vrot.lane.b32.xlu0 %v789, 20
        %v946 = vpop.permute.xlu0 %945
        %947 = vrot.lane.b32.xlu0 %v792, 20
        %v948 = vpop.permute.xlu0 %947
        %949 = vrot.lane.b32.xlu0 %v795, 20
        %v950 = vpop.permute.xlu0 %949
        %951 = vrot.lane.b32.xlu0 %v798, 20
        %v952 = vpop.permute.xlu0 %951
        %953 = vrot.lane.b32.xlu0 %v801, 20
        %v954 = vpop.permute.xlu0 %953
        %955 = vrot.lane.b32.xlu0 %v804, 20
        %v956 = vpop.permute.xlu0 %955
        %957 = vrot.lane.b32.xlu0 %v807, 20
        %v958 = vpop.permute.xlu0 %957
        %959 = vrot.lane.b32.xlu0 %v810, 20
        %v960 = vpop.permute.xlu0 %959
        %961 = vrot.lane.b32.xlu0 %v813, 20
        %v962 = vpop.permute.xlu0 %961
        %963 = vrot.lane.b32.xlu0 %v816, 20
        %v964 = vpop.permute.xlu0 %963
        %965 = vrot.lane.b32.xlu0 %v819, 20
        %v966 = vpop.permute.xlu0 %965
        %967 = vrot.lane.b32.xlu0 %v822, 20
        %v968 = vpop.permute.xlu0 %967
        %969 = vrot.lane.b32.xlu0 %v825, 20
        %v970 = vpop.permute.xlu0 %969
        %971 = vrot.lane.b32.xlu0 %v828, 20
        %v972 = vpop.permute.xlu0 %971
        %973 = vrot.lane.b32.xlu0 %v831, 20
        %v974 = vpop.permute.xlu0 %973
        %975 = vrot.lane.b32.xlu0 %v944, 20
        %v976 = vpop.permute.xlu0 %975
        %977 = vrot.lane.b32.xlu0 %v494, 24
        %v978 = vpop.permute.xlu0 %977
        %979 = vrot.lane.b32.xlu0 %v495, 24
        %v980 = vpop.permute.xlu0 %979
        %981 = vrot.lane.b32.xlu0 %v496, 24
        %v982 = vpop.permute.xlu0 %981
        %983 = vrot.lane.b32.xlu0 %v497, 24
        %v984 = vpop.permute.xlu0 %983
        %985 = vrot.lane.b32.xlu0 %v498, 24
        %v986 = vpop.permute.xlu0 %985
        %987 = vrot.lane.b32.xlu0 %v499, 24
        %v988 = vpop.permute.xlu0 %987
        %989 = vrot.lane.b32.xlu0 %v500, 24
        %v990 = vpop.permute.xlu0 %989
        %991 = vrot.lane.b32.xlu0 %v501, 24
        %v992 = vpop.permute.xlu0 %991
        %993 = vrot.lane.b32.xlu0 %v502, 24
        %v994 = vpop.permute.xlu0 %993
        %995 = vrot.lane.b32.xlu0 %v503, 24
        %v996 = vpop.permute.xlu0 %995
        %997 = vrot.lane.b32.xlu0 %v504, 24
        %v998 = vpop.permute.xlu0 %997
        %999 = vrot.lane.b32.xlu0 %v505, 24
        %v1000 = vpop.permute.xlu0 %999
        %1001 = vrot.lane.b32.xlu0 %v506, 24
        %v1002 = vpop.permute.xlu0 %1001
        %1003 = vrot.lane.b32.xlu0 %v507, 24
        %v1004 = vpop.permute.xlu0 %1003
        %1005 = vrot.lane.b32.xlu0 %v508, 24
        %v1006 = vpop.permute.xlu0 %1005
        %1007 = vrot.lane.b32.xlu0 %v492, 24
        %v1008 = vpop.permute.xlu0 %1007
        %1009 = vrot.lane.b32.xlu0 %v562, 28
        %v1010 = vpop.permute.xlu0 %1009
        %1011 = vrot.lane.b32.xlu0 %v574, 28
        %v1012 = vpop.permute.xlu0 %1011
        %1013 = vrot.lane.b32.xlu0 %v586, 28
        %v1014 = vpop.permute.xlu0 %1013
        %1015 = vrot.lane.b32.xlu0 %v598, 28
        %v1016 = vpop.permute.xlu0 %1015
        %1017 = vrot.lane.b32.xlu0 %v610, 28
        %v1018 = vpop.permute.xlu0 %1017
        %1019 = vrot.lane.b32.xlu0 %v622, 28
        %v1020 = vpop.permute.xlu0 %1019
        %1021 = vrot.lane.b32.xlu0 %v634, 28
        %v1022 = vpop.permute.xlu0 %1021
        %1023 = vrot.lane.b32.xlu0 %v646, 28
        %v1024 = vpop.permute.xlu0 %1023
        %1025 = vrot.lane.b32.xlu0 %v658, 28
        %v1026 = vpop.permute.xlu0 %1025
        %1027 = vrot.lane.b32.xlu0 %v670, 28
        %v1028 = vpop.permute.xlu0 %1027
        %1029 = vrot.lane.b32.xlu0 %v682, 28
        %v1030 = vpop.permute.xlu0 %1029
        %1031 = vrot.lane.b32.xlu0 %v694, 28
        %v1032 = vpop.permute.xlu0 %1031
        %1033 = vrot.lane.b32.xlu0 %v706, 28
        %v1034 = vpop.permute.xlu0 %1033
        %1035 = vrot.lane.b32.xlu0 %v718, 28
        %v1036 = vpop.permute.xlu0 %1035
        %1037 = vrot.lane.b32.xlu0 %v908, 28
        %v1038 = vpop.permute.xlu0 %1037
        %1039 = vrot.lane.b32.xlu0 %v538, 28
        %v1040 = vpop.permute.xlu0 %1039
        %1041 = vrot.lane.b32.xlu0 %v792, 32
        %v1042 = vpop.permute.xlu0 %1041
        %1043 = vrot.lane.b32.xlu0 %v795, 32
        %v1044 = vpop.permute.xlu0 %1043
        %1045 = vrot.lane.b32.xlu0 %v798, 32
        %v1046 = vpop.permute.xlu0 %1045
        %1047 = vrot.lane.b32.xlu0 %v801, 32
        %v1048 = vpop.permute.xlu0 %1047
        %1049 = vrot.lane.b32.xlu0 %v804, 32
        %v1050 = vpop.permute.xlu0 %1049
        %1051 = vrot.lane.b32.xlu0 %v807, 32
        %v1052 = vpop.permute.xlu0 %1051
        %1053 = vrot.lane.b32.xlu0 %v810, 32
        %v1054 = vpop.permute.xlu0 %1053
        %1055 = vrot.lane.b32.xlu0 %v813, 32
        %v1056 = vpop.permute.xlu0 %1055
        %1057 = vrot.lane.b32.xlu0 %v816, 32
        %v1058 = vpop.permute.xlu0 %1057
        %1059 = vrot.lane.b32.xlu0 %v819, 32
        %v1060 = vpop.permute.xlu0 %1059
        %1061 = vrot.lane.b32.xlu0 %v822, 32
        %v1062 = vpop.permute.xlu0 %1061
        %1063 = vrot.lane.b32.xlu0 %v825, 32
        %v1064 = vpop.permute.xlu0 %1063
        %1065 = vrot.lane.b32.xlu0 %v828, 32
        %v1066 = vpop.permute.xlu0 %1065
        %1067 = vrot.lane.b32.xlu0 %v831, 32
        %v1068 = vpop.permute.xlu0 %1067
        %1069 = vrot.lane.b32.xlu0 %v944, 32
        %v1070 = vpop.permute.xlu0 %1069
        %1071 = vrot.lane.b32.xlu0 %v786, 32
        %v1072 = vpop.permute.xlu0 %1071
        %vm1073 = vcmask 31744
        %v1075 = vsel %vm1073, %v492, %v720
        %v1077 = vsel %vm1073, %v493, %v722
        %v1079 = vsel %vm1073, %v494, %v724
        %v1081 = vsel %vm1073, %v495, %v726
        %v1083 = vsel %vm1073, %v496, %v728
        %v1085 = vsel %vm1073, %v497, %v730
        %v1087 = vsel %vm1073, %v498, %v732
        %v1089 = vsel %vm1073, %v499, %v734
        %v1091 = vsel %vm1073, %v500, %v736
        %v1093 = vsel %vm1073, %v501, %v738
        %v1095 = vsel %vm1073, %v502, %v740
        %v1097 = vsel %vm1073, %v503, %v742
        %v1099 = vsel %vm1073, %v504, %v744
        %v1101 = vsel %vm1073, %v505, %v746
        %v1103 = vsel %vm1073, %v506, %v748
        %v1105 = vsel %vm1073, %v507, %v750
        %vm1106 = vcmask 64512
        %v1108 = vsel %vm1106, %v1075, %v833
        %v1110 = vsel %vm1106, %v1077, %v835
        %v1112 = vsel %vm1106, %v1079, %v837
        %v1114 = vsel %vm1106, %v1081, %v839
        %v1116 = vsel %vm1106, %v1083, %v841
        %v1118 = vsel %vm1106, %v1085, %v843
        %v1120 = vsel %vm1106, %v1087, %v845
        %v1122 = vsel %vm1106, %v1089, %v847
        %v1124 = vsel %vm1106, %v1091, %v849
        %v1126 = vsel %vm1106, %v1093, %v851
        %v1128 = vsel %vm1106, %v1095, %v853
        %v1130 = vsel %vm1106, %v1097, %v855
        %v1132 = vsel %vm1106, %v1099, %v857
        %v1134 = vsel %vm1106, %v1101, %v859
        %v1136 = vsel %vm1106, %v1103, %v861
        %v1138 = vsel %vm1106, %v1105, %v863
        %vm1139 = vcmask 97280
        %v1141 = vsel %vm1139, %v1108, %v866
        %v1143 = vsel %vm1139, %v1110, %v868
        %v1145 = vsel %vm1139, %v1112, %v870
        %v1147 = vsel %vm1139, %v1114, %v872
        %v1149 = vsel %vm1139, %v1116, %v874
        %v1151 = vsel %vm1139, %v1118, %v876
        %v1153 = vsel %vm1139, %v1120, %v878
        %v1155 = vsel %vm1139, %v1122, %v880
        %v1157 = vsel %vm1139, %v1124, %v882
        %v1159 = vsel %vm1139, %v1126, %v884
        %v1161 = vsel %vm1139, %v1128, %v886
        %v1163 = vsel %vm1139, %v1130, %v888
        %v1165 = vsel %vm1139, %v1132, %v890
        %v1167 = vsel %vm1139, %v1134, %v892
        %v1169 = vsel %vm1139, %v1136, %v894
        %v1171 = vsel %vm1139, %v1138, %v896
        %vm1172 = vcmask 130048
        %v1174 = vsel %vm1172, %v1141, %v910
        %v1176 = vsel %vm1172, %v1143, %v912
        %v1178 = vsel %vm1172, %v1145, %v914
        %v1180 = vsel %vm1172, %v1147, %v916
        %v1182 = vsel %vm1172, %v1149, %v918
        %v1184 = vsel %vm1172, %v1151, %v920
        %v1186 = vsel %vm1172, %v1153, %v922
        %v1188 = vsel %vm1172, %v1155, %v924
        %v1190 = vsel %vm1172, %v1157, %v926
        %v1192 = vsel %vm1172, %v1159, %v928
        %v1194 = vsel %vm1172, %v1161, %v930
        %v1196 = vsel %vm1172, %v1163, %v932
        %v1198 = vsel %vm1172, %v1165, %v934
        %v1200 = vsel %vm1172, %v1167, %v936
        %v1202 = vsel %vm1172, %v1169, %v938
        %v1204 = vsel %vm1172, %v1171, %v940
        %vm1205 = vcmask 162816
        %v1207 = vsel %vm1205, %v1174, %v946
        %v1209 = vsel %vm1205, %v1176, %v948
        %v1211 = vsel %vm1205, %v1178, %v950
        %v1213 = vsel %vm1205, %v1180, %v952
        %v1215 = vsel %vm1205, %v1182, %v954
        %v1217 = vsel %vm1205, %v1184, %v956
        %v1219 = vsel %vm1205, %v1186, %v958
        %v1221 = vsel %vm1205, %v1188, %v960
        %v1223 = vsel %vm1205, %v1190, %v962
        %v1225 = vsel %vm1205, %v1192, %v964
        %v1227 = vsel %vm1205, %v1194, %v966
        %v1229 = vsel %vm1205, %v1196, %v968
        %v1231 = vsel %vm1205, %v1198, %v970
        %v1233 = vsel %vm1205, %v1200, %v972
        %v1235 = vsel %vm1205, %v1202, %v974
        %v1237 = vsel %vm1205, %v1204, %v976
        %vm1238 = vcmask 195584
        %v1240 = vsel %vm1238, %v1207, %v978
        %v1242 = vsel %vm1238, %v1209, %v980
        %v1244 = vsel %vm1238, %v1211, %v982
        %v1246 = vsel %vm1238, %v1213, %v984
        %v1248 = vsel %vm1238, %v1215, %v986
        %v1250 = vsel %vm1238, %v1217, %v988
        %v1252 = vsel %vm1238, %v1219, %v990
        %v1254 = vsel %vm1238, %v1221, %v992
        %v1256 = vsel %vm1238, %v1223, %v994
        %v1258 = vsel %vm1238, %v1225, %v996
        %v1260 = vsel %vm1238, %v1227, %v998
        %v1262 = vsel %vm1238, %v1229, %v1000
        %v1264 = vsel %vm1238, %v1231, %v1002
        %v1266 = vsel %vm1238, %v1233, %v1004
        %v1268 = vsel %vm1238, %v1235, %v1006
        %v1270 = vsel %vm1238, %v1237, %v1008
        %vm1271 = vcmask 228352
        %v1273 = vsel %vm1271, %v1240, %v1010
        %v1275 = vsel %vm1271, %v1242, %v1012
        %v1277 = vsel %vm1271, %v1244, %v1014
        %v1279 = vsel %vm1271, %v1246, %v1016
        %v1281 = vsel %vm1271, %v1248, %v1018
        %v1283 = vsel %vm1271, %v1250, %v1020
        %v1285 = vsel %vm1271, %v1252, %v1022
        %v1287 = vsel %vm1271, %v1254, %v1024
        %v1289 = vsel %vm1271, %v1256, %v1026
        %v1291 = vsel %vm1271, %v1258, %v1028
        %v1293 = vsel %vm1271, %v1260, %v1030
        %v1295 = vsel %vm1271, %v1262, %v1032
        %v1297 = vsel %vm1271, %v1264, %v1034
        %v1299 = vsel %vm1271, %v1266, %v1036
        %v1301 = vsel %vm1271, %v1268, %v1038
        %v1303 = vsel %vm1271, %v1270, %v1040
        %vm1304 = vcmask 261120
        %v1306 = vsel %vm1304, %v1273, %v1042
        %v1308 = vsel %vm1304, %v1275, %v1044
        %v1310 = vsel %vm1304, %v1277, %v1046
        %v1312 = vsel %vm1304, %v1279, %v1048
        %v1314 = vsel %vm1304, %v1281, %v1050
        %v1316 = vsel %vm1304, %v1283, %v1052
        %v1318 = vsel %vm1304, %v1285, %v1054
        %v1320 = vsel %vm1304, %v1287, %v1056
        %v1322 = vsel %vm1304, %v1289, %v1058
        %v1324 = vsel %vm1304, %v1291, %v1060
        %v1326 = vsel %vm1304, %v1293, %v1062
        %v1328 = vsel %vm1304, %v1295, %v1064
        %v1330 = vsel %vm1304, %v1297, %v1066
        %v1332 = vsel %vm1304, %v1299, %v1068
        %v1334 = vsel %vm1304, %v1301, %v1070
        %v1336 = vsel %vm1304, %v1303, %v1072
        %v1337 = vld [vmem:[%s1] sm:$0xf]
        %v1338 = vld [vmem:[%s1 + $0x4] sm:$0xf]
        %v1339 = vld [vmem:[%s1 + $0x8] sm:$0xf]
        %v1340 = vld [vmem:[%s1 + $0xc] sm:$0xf]
        %v1341 = vld [vmem:[%s1 + $0x10] sm:$0x3]
        %v1342 = vld [vmem:[%s2] sm:$0x1]
        %v1344 = vlaneseq
        %v1345 = vshrl.u32 %v1344, 7
        %v1346 = vsub.s32 0, %v1345
        %v1347 = vrot.slane %v1342, %v1346
        %v1354 = vunpack.c.l.b16 %v1337
        %v1355 = vunpack.c.l.b16 %v1338
        %v1356 = vunpack.c.l.b16 %v1339
        %v1357 = vunpack.c.l.b16 %v1340
        %v1358 = vunpack.c.l.b16 %v1341
        %v1359 = vpack.c.b16 %v1355, %v1354
        %v1360 = vpack.c.b16 %v1357, %v1356
        %v1361 = vpack.c.b16 %v1358, %v1358
        %vm1364 = vcmask 293888
        %v1365 = vsel %vm1364, %v1306, 0
        %v1367 = vsel %vm1364, %v1308, 0
        %v1369 = vsel %vm1364, %v1310, 0
        %v1371 = vsel %vm1364, %v1312, 0
        %v1373 = vsel %vm1364, %v1314, 0
        %v1375 = vsel %vm1364, %v1316, 0
        %v1377 = vsel %vm1364, %v1318, 0
        %v1379 = vsel %vm1364, %v1320, 0
        %v1381 = vsel %vm1364, %v1322, 0
        %v1383 = vsel %vm1364, %v1324, 0
        %v1385 = vsel %vm1364, %v1326, 0
        %v1387 = vsel %vm1364, %v1328, 0
        %v1389 = vsel %vm1364, %v1330, 0
        %v1391 = vsel %vm1364, %v1332, 0
        %v1393 = vsel %vm1364, %v1334, 0
        %v1395 = vsel %vm1364, %v1336, 0
        %vm1397 = vcmask 1041408
        %v1399 = vsel %vm1397, %v1361, 0
        %1401 = vmatprep.subr.bf16.mxu0 0
        %1402 = vmatpush1.bf16.msra.mxu0 %v1359
        %1403 = vmatprep.subr.bf16.mxu0 0
        %1404 = vmatpush1.bf16.msra.mxu0 %v1360
        %1405 = vmatprep.subr.bf16.mxu0 0
        %1406 = vmatpush1.bf16.msra.mxu0 %v1399
        %1407 = vmatprep.subr.bf16.mxu0 0
        %1408 = vmatpush1.bf16.msra.mxu0 0
        %1409 = vmatprep.subr.bf16.mxu0 0
        %1410 = vmatpush1.bf16.msra.mxu0 0
        %1411 = vmatprep.subr.bf16.mxu0 0
        %1412 = vmatpush1.bf16.msra.mxu0 0
        %1413 = vmatprep.subr.bf16.mxu0 0
        %1414 = vmatpush1.bf16.msra.mxu0 0
        %1415 = vmatprep.subr.bf16.mxu0 0
        %1416 = vmatpush1.bf16.msra.mxu0 0
        %1417 = vmatprep.subr.bf16.mxu0 0
        %1418 = vmatpush1.bf16.msra.mxu0 0
        %1419 = vmatprep.subr.bf16.mxu0 0
        %1420 = vmatpush1.bf16.msra.mxu0 0
        %1421 = vmatprep.subr.bf16.mxu0 0
        %1422 = vmatpush1.bf16.msra.mxu0 0
        %1423 = vmatprep.subr.bf16.mxu0 0
        %1424 = vmatpush1.bf16.msra.mxu0 0
        %1425 = vmatprep.subr.bf16.mxu0 0
        %1426 = vmatpush1.bf16.msra.mxu0 0
        %1427 = vmatprep.subr.bf16.mxu0 0
        %1428 = vmatpush1.bf16.msra.mxu0 0
        %1429 = vmatprep.subr.bf16.mxu0 0
        %1430 = vmatpush1.bf16.msra.mxu0 0
        %1431 = vmatprep.subr.bf16.mxu0 0
        %1432 = vmatpush1.bf16.msra.mxu0 0
        %1433 = vmatprep.mubr.bf16.mxu0 0
        %1434 = vmatmul.mubr.bf16.gmra.mrb[0].mxu0 %v1365
        %v1435 = vpop.f32.mrb[0].mxu0
        %v1436 = vadd.f32 %v1347, %v1435
        %v1437 = vpop.f32.mrb[0].mxu0
        %v1438 = vpop.f32.mrb[0].mxu0
        %v1439 = vadd.f32 %v1347, %v1438
        %v1440 = vpop.f32.mrb[0].mxu0
        %1441 = vmatprep.mubr.bf16.mxu0 0
        %1442 = vmatmul.mubr.bf16.gmra.mrb[0].mxu0 %v1367
        %v1443 = vpop.f32.mrb[0].mxu0
        %v1444 = vadd.f32 %v1347, %v1443
        %v1445 = vpop.f32.mrb[0].mxu0
        %v1446 = vpop.f32.mrb[0].mxu0
        %v1447 = vadd.f32 %v1347, %v1446
        %v1448 = vpop.f32.mrb[0].mxu0
        %1449 = vmatprep.mubr.bf16.mxu0 0
        %1450 = vmatmul.mubr.bf16.gmra.mrb[0].mxu0 %v1369
        %v1451 = vpop.f32.mrb[0].mxu0
        %v1452 = vadd.f32 %v1347, %v1451
        %v1453 = vpop.f32.mrb[0].mxu0
        %v1454 = vpop.f32.mrb[0].mxu0
        %v1455 = vadd.f32 %v1347, %v1454
        %v1456 = vpop.f32.mrb[0].mxu0
        %1457 = vmatprep.mubr.bf16.mxu0 0
        %1458 = vmatmul.mubr.bf16.gmra.mrb[0].mxu0 %v1371
        %v1459 = vpop.f32.mrb[0].mxu0
        %v1460 = vadd.f32 %v1347, %v1459
        %v1461 = vpop.f32.mrb[0].mxu0
        %v1462 = vpop.f32.mrb[0].mxu0
        %v1463 = vadd.f32 %v1347, %v1462
        %v1464 = vpop.f32.mrb[0].mxu0
        %1465 = vmatprep.mubr.bf16.mxu0 0
        %1466 = vmatmul.mubr.bf16.gmra.mrb[0].mxu0 %v1373
        %v1467 = vpop.f32.mrb[0].mxu0
        %v1468 = vadd.f32 %v1347, %v1467
        %v1469 = vpop.f32.mrb[0].mxu0
        %v1470 = vpop.f32.mrb[0].mxu0
        %v1471 = vadd.f32 %v1347, %v1470
        %v1472 = vpop.f32.mrb[0].mxu0
        %1473 = vmatprep.mubr.bf16.mxu0 0
        %1474 = vmatmul.mubr.bf16.gmra.mrb[0].mxu0 %v1375
        %v1475 = vpop.f32.mrb[0].mxu0
        %v1476 = vadd.f32 %v1347, %v1475
        %v1477 = vpop.f32.mrb[0].mxu0
        %v1478 = vpop.f32.mrb[0].mxu0
        %v1479 = vadd.f32 %v1347, %v1478
        %v1480 = vpop.f32.mrb[0].mxu0
        %1481 = vmatprep.mubr.bf16.mxu0 0
        %1482 = vmatmul.mubr.bf16.gmra.mrb[0].mxu0 %v1377
        %v1483 = vpop.f32.mrb[0].mxu0
        %v1484 = vadd.f32 %v1347, %v1483
        %v1485 = vpop.f32.mrb[0].mxu0
        %v1486 = vpop.f32.mrb[0].mxu0
        %v1487 = vadd.f32 %v1347, %v1486
        %v1488 = vpop.f32.mrb[0].mxu0
        %1489 = vmatprep.mubr.bf16.mxu0 0
        %1490 = vmatmul.mubr.bf16.gmra.mrb[0].mxu0 %v1379
        %v1491 = vpop.f32.mrb[0].mxu0
        %v1492 = vadd.f32 %v1347, %v1491
        %v1493 = vpop.f32.mrb[0].mxu0
        %v1494 = vpop.f32.mrb[0].mxu0
        %v1495 = vadd.f32 %v1347, %v1494
        %v1496 = vpop.f32.mrb[0].mxu0
        %1497 = vmatprep.mubr.bf16.mxu0 0
        %1498 = vmatmul.mubr.bf16.gmra.mrb[0].mxu0 %v1381
        %v1499 = vpop.f32.mrb[0].mxu0
        %v1500 = vadd.f32 %v1347, %v1499
        %v1501 = vpop.f32.mrb[0].mxu0
        %v1502 = vpop.f32.mrb[0].mxu0
        %v1503 = vadd.f32 %v1347, %v1502
        %v1504 = vpop.f32.mrb[0].mxu0
        %1505 = vmatprep.mubr.bf16.mxu0 0
        %1506 = vmatmul.mubr.bf16.gmra.mrb[0].mxu0 %v1383
        %v1507 = vpop.f32.mrb[0].mxu0
        %v1508 = vadd.f32 %v1347, %v1507
        %v1509 = vpop.f32.mrb[0].mxu0
        %v1510 = vpop.f32.mrb[0].mxu0
        %v1511 = vadd.f32 %v1347, %v1510
        %v1512 = vpop.f32.mrb[0].mxu0
        %1513 = vmatprep.mubr.bf16.mxu0 0
        %1514 = vmatmul.mubr.bf16.gmra.mrb[0].mxu0 %v1385
        %v1515 = vpop.f32.mrb[0].mxu0
        %v1516 = vadd.f32 %v1347, %v1515
        %v1517 = vpop.f32.mrb[0].mxu0
        %v1518 = vpop.f32.mrb[0].mxu0
        %v1519 = vadd.f32 %v1347, %v1518
        %v1520 = vpop.f32.mrb[0].mxu0
        %1521 = vmatprep.mubr.bf16.mxu0 0
        %1522 = vmatmul.mubr.bf16.gmra.mrb[0].mxu0 %v1387
        %v1523 = vpop.f32.mrb[0].mxu0
        %v1524 = vadd.f32 %v1347, %v1523
        %v1525 = vpop.f32.mrb[0].mxu0
        %v1526 = vpop.f32.mrb[0].mxu0
        %v1527 = vadd.f32 %v1347, %v1526
        %v1528 = vpop.f32.mrb[0].mxu0
        %1529 = vmatprep.mubr.bf16.mxu0 0
        %1530 = vmatmul.mubr.bf16.gmra.mrb[0].mxu0 %v1389
        %v1531 = vpop.f32.mrb[0].mxu0
        %v1532 = vadd.f32 %v1347, %v1531
        %v1533 = vpop.f32.mrb[0].mxu0
        %v1534 = vpop.f32.mrb[0].mxu0
        %v1535 = vadd.f32 %v1347, %v1534
        %v1536 = vpop.f32.mrb[0].mxu0
        %1537 = vmatprep.mubr.bf16.mxu0 0
        %1538 = vmatmul.mubr.bf16.gmra.mrb[0].mxu0 %v1391
        %v1539 = vpop.f32.mrb[0].mxu0
        %v1540 = vadd.f32 %v1347, %v1539
        %v1541 = vpop.f32.mrb[0].mxu0
        %v1542 = vpop.f32.mrb[0].mxu0
        %v1543 = vadd.f32 %v1347, %v1542
        %v1544 = vpop.f32.mrb[0].mxu0
        %1545 = vmatprep.mubr.bf16.mxu0 0
        %1546 = vmatmul.mubr.bf16.gmra.mrb[0].mxu0 %v1393
        %v1547 = vpop.f32.mrb[0].mxu0
        %v1548 = vadd.f32 %v1347, %v1547
        %v1549 = vpop.f32.mrb[0].mxu0
        %v1550 = vpop.f32.mrb[0].mxu0
        %v1551 = vadd.f32 %v1347, %v1550
        %v1552 = vpop.f32.mrb[0].mxu0
        %1553 = vmatprep.mubr.bf16.mxu0 0
        %1554 = vmatmul.mubr.bf16.gmra.mrb[0].mxu0 %v1395
        %v1555 = vpop.f32.mrb[0].mxu0
        %v1556 = vadd.f32 %v1347, %v1555
        %v1557 = vpop.f32.mrb[0].mxu0
        %v1558 = vpop.f32.mrb[0].mxu0
        %v1559 = vadd.f32 %v1347, %v1558
        %v1560 = vpop.f32.mrb[0].mxu0
        %1561 = vdwg.mxu0
        %vm1562 = vcmp.gt.f32.partialorder %v1436, 0.0
        %vm1563 = vcmp.gt.f32.partialorder %v1439, 0.0
        %vm1564 = vcmp.gt.f32.partialorder %v1444, 0.0
        %vm1565 = vcmp.gt.f32.partialorder %v1447, 0.0
        %vm1566 = vcmp.gt.f32.partialorder %v1452, 0.0
        %vm1567 = vcmp.gt.f32.partialorder %v1455, 0.0
        %vm1568 = vcmp.gt.f32.partialorder %v1460, 0.0
        %vm1569 = vcmp.gt.f32.partialorder %v1463, 0.0
        %vm1570 = vcmp.gt.f32.partialorder %v1468, 0.0
        %vm1571 = vcmp.gt.f32.partialorder %v1471, 0.0
        %vm1572 = vcmp.gt.f32.partialorder %v1476, 0.0
        %vm1573 = vcmp.gt.f32.partialorder %v1479, 0.0
        %vm1574 = vcmp.gt.f32.partialorder %v1484, 0.0
        %vm1575 = vcmp.gt.f32.partialorder %v1487, 0.0
        %vm1576 = vcmp.gt.f32.partialorder %v1492, 0.0
        %vm1577 = vcmp.gt.f32.partialorder %v1495, 0.0
        %vm1578 = vcmp.gt.f32.partialorder %v1500, 0.0
        %vm1579 = vcmp.gt.f32.partialorder %v1503, 0.0
        %vm1580 = vcmp.gt.f32.partialorder %v1508, 0.0
        %vm1581 = vcmp.gt.f32.partialorder %v1511, 0.0
        %vm1582 = vcmp.gt.f32.partialorder %v1516, 0.0
        %vm1583 = vcmp.gt.f32.partialorder %v1519, 0.0
        %vm1584 = vcmp.gt.f32.partialorder %v1524, 0.0
        %vm1585 = vcmp.gt.f32.partialorder %v1527, 0.0
        %vm1586 = vcmp.gt.f32.partialorder %v1532, 0.0
        %vm1587 = vcmp.gt.f32.partialorder %v1535, 0.0
        %vm1588 = vcmp.gt.f32.partialorder %v1540, 0.0
        %vm1589 = vcmp.gt.f32.partialorder %v1543, 0.0
        %vm1590 = vcmp.gt.f32.partialorder %v1548, 0.0
        %vm1591 = vcmp.gt.f32.partialorder %v1551, 0.0
        %vm1592 = vcmp.gt.f32.partialorder %v1556, 0.0
        %vm1593 = vcmp.gt.f32.partialorder %v1559, 0.0
        %v1594 = vmul.f32 %v1436, 0.2
        %v1595 = vmul.f32 %v1439, 0.2
        %v1596 = vmul.f32 %v1444, 0.2
        %v1597 = vmul.f32 %v1447, 0.2
        %v1598 = vmul.f32 %v1452, 0.2
        %v1599 = vmul.f32 %v1455, 0.2
        %v1600 = vmul.f32 %v1460, 0.2
        %v1601 = vmul.f32 %v1463, 0.2
        %v1602 = vmul.f32 %v1468, 0.2
        %v1603 = vmul.f32 %v1471, 0.2
        %v1604 = vmul.f32 %v1476, 0.2
        %v1605 = vmul.f32 %v1479, 0.2
        %v1606 = vmul.f32 %v1484, 0.2
        %v1607 = vmul.f32 %v1487, 0.2
        %v1608 = vmul.f32 %v1492, 0.2
        %v1609 = vmul.f32 %v1495, 0.2
        %v1610 = vmul.f32 %v1500, 0.2
        %v1611 = vmul.f32 %v1503, 0.2
        %v1612 = vmul.f32 %v1508, 0.2
        %v1613 = vmul.f32 %v1511, 0.2
        %v1614 = vmul.f32 %v1516, 0.2
        %v1615 = vmul.f32 %v1519, 0.2
        %v1616 = vmul.f32 %v1524, 0.2
        %v1617 = vmul.f32 %v1527, 0.2
        %v1618 = vmul.f32 %v1532, 0.2
        %v1619 = vmul.f32 %v1535, 0.2
        %v1620 = vmul.f32 %v1540, 0.2
        %v1621 = vmul.f32 %v1543, 0.2
        %v1622 = vmul.f32 %v1548, 0.2
        %v1623 = vmul.f32 %v1551, 0.2
        %v1624 = vmul.f32 %v1556, 0.2
        %v1625 = vmul.f32 %v1559, 0.2
        %v1626 = vsel %vm1562, %v1436, %v1594
        %v1627 = vsel %vm1563, %v1439, %v1595
        %v1628 = vsel %vm1564, %v1444, %v1596
        %v1629 = vsel %vm1565, %v1447, %v1597
        %v1630 = vsel %vm1566, %v1452, %v1598
        %v1631 = vsel %vm1567, %v1455, %v1599
        %v1632 = vsel %vm1568, %v1460, %v1600
        %v1633 = vsel %vm1569, %v1463, %v1601
        %v1634 = vsel %vm1570, %v1468, %v1602
        %v1635 = vsel %vm1571, %v1471, %v1603
        %v1636 = vsel %vm1572, %v1476, %v1604
        %v1637 = vsel %vm1573, %v1479, %v1605
        %v1638 = vsel %vm1574, %v1484, %v1606
        %v1639 = vsel %vm1575, %v1487, %v1607
        %v1640 = vsel %vm1576, %v1492, %v1608
        %v1641 = vsel %vm1577, %v1495, %v1609
        %v1642 = vsel %vm1578, %v1500, %v1610
        %v1643 = vsel %vm1579, %v1503, %v1611
        %v1644 = vsel %vm1580, %v1508, %v1612
        %v1645 = vsel %vm1581, %v1511, %v1613
        %v1646 = vsel %vm1582, %v1516, %v1614
        %v1647 = vsel %vm1583, %v1519, %v1615
        %v1648 = vsel %vm1584, %v1524, %v1616
        %v1649 = vsel %vm1585, %v1527, %v1617
        %v1650 = vsel %vm1586, %v1532, %v1618
        %v1651 = vsel %vm1587, %v1535, %v1619
        %v1652 = vsel %vm1588, %v1540, %v1620
        %v1653 = vsel %vm1589, %v1543, %v1621
        %v1654 = vsel %vm1590, %v1548, %v1622
        %v1655 = vsel %vm1591, %v1551, %v1623
        %v1656 = vsel %vm1592, %v1556, %v1624
        %v1657 = vsel %vm1593, %v1559, %v1625
        %v1658 = vpack.c.bf16 %v1627, %v1626
        %v1659 = vpack.c.bf16 %v1629, %v1628
        %v1660 = vpack.c.bf16 %v1631, %v1630
        %v1661 = vpack.c.bf16 %v1633, %v1632
        %v1662 = vpack.c.bf16 %v1635, %v1634
        %v1663 = vpack.c.bf16 %v1637, %v1636
        %v1664 = vpack.c.bf16 %v1639, %v1638
        %v1665 = vpack.c.bf16 %v1641, %v1640
        %v1666 = vpack.c.bf16 %v1643, %v1642
        %v1667 = vpack.c.bf16 %v1645, %v1644
        %v1668 = vpack.c.bf16 %v1647, %v1646
        %v1669 = vpack.c.bf16 %v1649, %v1648
        %v1670 = vpack.c.bf16 %v1651, %v1650
        %v1671 = vpack.c.bf16 %v1653, %v1652
        %v1672 = vpack.c.bf16 %v1655, %v1654
        %v1673 = vpack.c.bf16 %v1657, %v1656
        %v1675 = vshrl.u32 %v1658, 16
        %v1677 = vrot.slane %v1675, 7
        %v1678 = vshll.u32 %v1658, 16
        %v1680 = vor.u32 %v1677, %v1678
        %v1682 = vshrl.u32 %v1659, 16
        %v1684 = vrot.slane %v1682, 7
        %v1685 = vshll.u32 %v1659, 16
        %v1687 = vor.u32 %v1684, %v1685
        %v1689 = vshrl.u32 %v1660, 16
        %v1691 = vrot.slane %v1689, 7
        %v1692 = vshll.u32 %v1660, 16
        %v1694 = vor.u32 %v1691, %v1692
        %v1696 = vshrl.u32 %v1661, 16
        %v1698 = vrot.slane %v1696, 7
        %v1699 = vshll.u32 %v1661, 16
        %v1701 = vor.u32 %v1698, %v1699
        %v1703 = vshrl.u32 %v1662, 16
        %v1705 = vrot.slane %v1703, 7
        %v1706 = vshll.u32 %v1662, 16
        %v1708 = vor.u32 %v1705, %v1706
        %v1710 = vshrl.u32 %v1663, 16
        %v1712 = vrot.slane %v1710, 7
        %v1713 = vshll.u32 %v1663, 16
        %v1715 = vor.u32 %v1712, %v1713
        %v1717 = vshrl.u32 %v1664, 16
        %v1719 = vrot.slane %v1717, 7
        %v1720 = vshll.u32 %v1664, 16
        %v1722 = vor.u32 %v1719, %v1720
        %v1724 = vshrl.u32 %v1665, 16
        %v1726 = vrot.slane %v1724, 7
        %v1727 = vshll.u32 %v1665, 16
        %v1729 = vor.u32 %v1726, %v1727
        %v1731 = vshrl.u32 %v1666, 16
        %v1733 = vrot.slane %v1731, 7
        %v1734 = vshll.u32 %v1666, 16
        %v1736 = vor.u32 %v1733, %v1734
        %v1738 = vshrl.u32 %v1667, 16
        %v1740 = vrot.slane %v1738, 7
        %v1741 = vshll.u32 %v1667, 16
        %v1743 = vor.u32 %v1740, %v1741
        %v1745 = vshrl.u32 %v1668, 16
        %v1747 = vrot.slane %v1745, 7
        %v1748 = vshll.u32 %v1668, 16
        %v1750 = vor.u32 %v1747, %v1748
        %v1752 = vshrl.u32 %v1669, 16
        %v1754 = vrot.slane %v1752, 7
        %v1755 = vshll.u32 %v1669, 16
        %v1757 = vor.u32 %v1754, %v1755
        %v1759 = vshrl.u32 %v1670, 16
        %v1761 = vrot.slane %v1759, 7
        %v1762 = vshll.u32 %v1670, 16
        %v1764 = vor.u32 %v1761, %v1762
        %v1766 = vshrl.u32 %v1671, 16
        %v1768 = vrot.slane %v1766, 7
        %v1769 = vshll.u32 %v1671, 16
        %v1771 = vor.u32 %v1768, %v1769
        %v1773 = vshrl.u32 %v1672, 16
        %v1775 = vrot.slane %v1773, 7
        %v1776 = vshll.u32 %v1672, 16
        %v1778 = vor.u32 %v1775, %v1776
        %v1780 = vshrl.u32 %v1673, 16
        %v1782 = vrot.slane %v1780, 7
        %v1783 = vshll.u32 %v1673, 16
        %v1785 = vor.u32 %v1782, %v1783
        %v1818 = vsel %vm491, 0, %v1680
        %v1819 = vsel %vm491, 0, %v1687
        %v1820 = vsel %vm491, 0, %v1694
        %v1821 = vsel %vm491, 0, %v1701
        %v1822 = vsel %vm491, 0, %v1708
        %v1823 = vsel %vm491, 0, %v1715
        %v1824 = vsel %vm491, 0, %v1722
        %v1825 = vsel %vm491, 0, %v1729
        %v1826 = vsel %vm491, 0, %v1736
        %v1827 = vsel %vm491, 0, %v1743
        %v1828 = vsel %vm491, 0, %v1750
        %v1829 = vsel %vm491, 0, %v1757
        %v1830 = vsel %vm491, 0, %v1764
        %v1831 = vsel %vm491, 0, %v1771
        %v1832 = vsel %vm491, 0, %v1778
        %v1833 = vsel %vm491, 0, %v1785
        %v1834 = vsel %vm491, %v1677, 0
        %v1835 = vsel %vm491, %v1684, 0
        %v1836 = vsel %vm491, %v1691, 0
        %v1837 = vsel %vm491, %v1698, 0
        %v1838 = vsel %vm491, %v1705, 0
        %v1839 = vsel %vm491, %v1712, 0
        %v1840 = vsel %vm491, %v1719, 0
        %v1841 = vsel %vm491, %v1726, 0
        %v1842 = vsel %vm491, %v1733, 0
        %v1843 = vsel %vm491, %v1740, 0
        %v1844 = vsel %vm491, %v1747, 0
        %v1845 = vsel %vm491, %v1754, 0
        %v1846 = vsel %vm491, %v1761, 0
        %v1847 = vsel %vm491, %v1768, 0
        %v1848 = vsel %vm491, %v1775, 0
        %v1849 = vsel %vm491, %v1782, 0
        %v1851 = vshrl.u32 %v1818, 16
        %v1853 = vshll.u32 %v1818, 16
        %v1855 = vrot.slane %v1853, 1
        %v1856 = vor.u32 %v1851, %v1855
        %v1858 = vshll.u32 %v1834, 16
        %v1860 = vrot.slane %v1858, 1
        %v1861 = vsel %vm526, %v1856, %v1860
        %v1863 = vshrl.u32 %v1819, 16
        %v1865 = vshll.u32 %v1819, 16
        %v1867 = vrot.slane %v1865, 1
        %v1868 = vor.u32 %v1863, %v1867
        %v1870 = vshll.u32 %v1835, 16
        %v1872 = vrot.slane %v1870, 1
        %v1873 = vsel %vm526, %v1868, %v1872
        %v1875 = vshrl.u32 %v1820, 16
        %v1877 = vshll.u32 %v1820, 16
        %v1879 = vrot.slane %v1877, 1
        %v1880 = vor.u32 %v1875, %v1879
        %v1882 = vshll.u32 %v1836, 16
        %v1884 = vrot.slane %v1882, 1
        %v1885 = vsel %vm526, %v1880, %v1884
        %v1887 = vshrl.u32 %v1821, 16
        %v1889 = vshll.u32 %v1821, 16
        %v1891 = vrot.slane %v1889, 1
        %v1892 = vor.u32 %v1887, %v1891
        %v1894 = vshll.u32 %v1837, 16
        %v1896 = vrot.slane %v1894, 1
        %v1897 = vsel %vm526, %v1892, %v1896
        %v1899 = vshrl.u32 %v1822, 16
        %v1901 = vshll.u32 %v1822, 16
        %v1903 = vrot.slane %v1901, 1
        %v1904 = vor.u32 %v1899, %v1903
        %v1906 = vshll.u32 %v1838, 16
        %v1908 = vrot.slane %v1906, 1
        %v1909 = vsel %vm526, %v1904, %v1908
        %v1911 = vshrl.u32 %v1823, 16
        %v1913 = vshll.u32 %v1823, 16
        %v1915 = vrot.slane %v1913, 1
        %v1916 = vor.u32 %v1911, %v1915
        %v1918 = vshll.u32 %v1839, 16
        %v1920 = vrot.slane %v1918, 1
        %v1921 = vsel %vm526, %v1916, %v1920
        %v1923 = vshrl.u32 %v1824, 16
        %v1925 = vshll.u32 %v1824, 16
        %v1927 = vrot.slane %v1925, 1
        %v1928 = vor.u32 %v1923, %v1927
        %v1930 = vshll.u32 %v1840, 16
        %v1932 = vrot.slane %v1930, 1
        %v1933 = vsel %vm526, %v1928, %v1932
        %v1935 = vshrl.u32 %v1825, 16
        %v1937 = vshll.u32 %v1825, 16
        %v1939 = vrot.slane %v1937, 1
        %v1940 = vor.u32 %v1935, %v1939
        %v1942 = vshll.u32 %v1841, 16
        %v1944 = vrot.slane %v1942, 1
        %v1945 = vsel %vm526, %v1940, %v1944
        %v1947 = vshrl.u32 %v1826, 16
        %v1949 = vshll.u32 %v1826, 16
        %v1951 = vrot.slane %v1949, 1
        %v1952 = vor.u32 %v1947, %v1951
        %v1954 = vshll.u32 %v1842, 16
        %v1956 = vrot.slane %v1954, 1
        %v1957 = vsel %vm526, %v1952, %v1956
        %v1959 = vshrl.u32 %v1827, 16
        %v1961 = vshll.u32 %v1827, 16
        %v1963 = vrot.slane %v1961, 1
        %v1964 = vor.u32 %v1959, %v1963
        %v1966 = vshll.u32 %v1843, 16
        %v1968 = vrot.slane %v1966, 1
        %v1969 = vsel %vm526, %v1964, %v1968
        %v1971 = vshrl.u32 %v1828, 16
        %v1973 = vshll.u32 %v1828, 16
        %v1975 = vrot.slane %v1973, 1
        %v1976 = vor.u32 %v1971, %v1975
        %v1978 = vshll.u32 %v1844, 16
        %v1980 = vrot.slane %v1978, 1
        %v1981 = vsel %vm526, %v1976, %v1980
        %v1983 = vshrl.u32 %v1829, 16
        %v1985 = vshll.u32 %v1829, 16
        %v1987 = vrot.slane %v1985, 1
        %v1988 = vor.u32 %v1983, %v1987
        %v1990 = vshll.u32 %v1845, 16
        %v1992 = vrot.slane %v1990, 1
        %v1993 = vsel %vm526, %v1988, %v1992
        %v1995 = vshrl.u32 %v1830, 16
        %v1997 = vshll.u32 %v1830, 16
        %v1999 = vrot.slane %v1997, 1
        %v2000 = vor.u32 %v1995, %v1999
        %v2002 = vshll.u32 %v1846, 16
        %v2004 = vrot.slane %v2002, 1
        %v2005 = vsel %vm526, %v2000, %v2004
        %v2007 = vshrl.u32 %v1831, 16
        %v2009 = vshll.u32 %v1831, 16
        %v2011 = vrot.slane %v2009, 1
        %v2012 = vor.u32 %v2007, %v2011
        %v2014 = vshll.u32 %v1847, 16
        %v2016 = vrot.slane %v2014, 1
        %v2017 = vsel %vm526, %v2012, %v2016
        %v2019 = vshrl.u32 %v1832, 16
        %v2021 = vshll.u32 %v1832, 16
        %v2023 = vrot.slane %v2021, 1
        %v2024 = vor.u32 %v2019, %v2023
        %v2026 = vshll.u32 %v1848, 16
        %v2028 = vrot.slane %v2026, 1
        %v2029 = vsel %vm526, %v2024, %v2028
        %2030 = vrot.lane.b32.xlu0 %v1861, 4
        %v2031 = vpop.permute.xlu0 %2030
        %2032 = vrot.lane.b32.xlu0 %v1873, 4
        %v2033 = vpop.permute.xlu0 %2032
        %2034 = vrot.lane.b32.xlu0 %v1885, 4
        %v2035 = vpop.permute.xlu0 %2034
        %2036 = vrot.lane.b32.xlu0 %v1897, 4
        %v2037 = vpop.permute.xlu0 %2036
        %2038 = vrot.lane.b32.xlu0 %v1909, 4
        %v2039 = vpop.permute.xlu0 %2038
        %2040 = vrot.lane.b32.xlu0 %v1921, 4
        %v2041 = vpop.permute.xlu0 %2040
        %2042 = vrot.lane.b32.xlu0 %v1933, 4
        %v2043 = vpop.permute.xlu0 %2042
        %2044 = vrot.lane.b32.xlu0 %v1945, 4
        %v2045 = vpop.permute.xlu0 %2044
        %2046 = vrot.lane.b32.xlu0 %v1957, 4
        %v2047 = vpop.permute.xlu0 %2046
        %2048 = vrot.lane.b32.xlu0 %v1969, 4
        %v2049 = vpop.permute.xlu0 %2048
        %2050 = vrot.lane.b32.xlu0 %v1981, 4
        %v2051 = vpop.permute.xlu0 %2050
        %2052 = vrot.lane.b32.xlu0 %v1993, 4
        %v2053 = vpop.permute.xlu0 %2052
        %2054 = vrot.lane.b32.xlu0 %v2005, 4
        %v2055 = vpop.permute.xlu0 %2054
        %2056 = vrot.lane.b32.xlu0 %v2017, 4
        %v2057 = vpop.permute.xlu0 %2056
        %2058 = vrot.lane.b32.xlu0 %v2029, 4
        %v2059 = vpop.permute.xlu0 %2058
        %v2090 = vrot.slane %v1818, 1
        %v2091 = vrot.slane %v1834, 1
        %v2092 = vsel %vm783, %v2090, %v2091
        %v2093 = vrot.slane %v1819, 1
        %v2094 = vrot.slane %v1835, 1
        %v2095 = vsel %vm783, %v2093, %v2094
        %v2096 = vrot.slane %v1820, 1
        %v2097 = vrot.slane %v1836, 1
        %v2098 = vsel %vm783, %v2096, %v2097
        %v2099 = vrot.slane %v1821, 1
        %v2100 = vrot.slane %v1837, 1
        %v2101 = vsel %vm783, %v2099, %v2100
        %v2102 = vrot.slane %v1822, 1
        %v2103 = vrot.slane %v1838, 1
        %v2104 = vsel %vm783, %v2102, %v2103
        %v2105 = vrot.slane %v1823, 1
        %v2106 = vrot.slane %v1839, 1
        %v2107 = vsel %vm783, %v2105, %v2106
        %v2108 = vrot.slane %v1824, 1
        %v2109 = vrot.slane %v1840, 1
        %v2110 = vsel %vm783, %v2108, %v2109
        %v2111 = vrot.slane %v1825, 1
        %v2112 = vrot.slane %v1841, 1
        %v2113 = vsel %vm783, %v2111, %v2112
        %v2114 = vrot.slane %v1826, 1
        %v2115 = vrot.slane %v1842, 1
        %v2116 = vsel %vm783, %v2114, %v2115
        %v2117 = vrot.slane %v1827, 1
        %v2118 = vrot.slane %v1843, 1
        %v2119 = vsel %vm783, %v2117, %v2118
        %v2120 = vrot.slane %v1828, 1
        %v2121 = vrot.slane %v1844, 1
        %v2122 = vsel %vm783, %v2120, %v2121
        %v2123 = vrot.slane %v1829, 1
        %v2124 = vrot.slane %v1845, 1
        %v2125 = vsel %vm783, %v2123, %v2124
        %v2126 = vrot.slane %v1830, 1
        %v2127 = vrot.slane %v1846, 1
        %v2128 = vsel %vm783, %v2126, %v2127
        %v2129 = vrot.slane %v1831, 1
        %v2130 = vrot.slane %v1847, 1
        %v2131 = vsel %vm783, %v2129, %v2130
        %v2132 = vrot.slane %v1832, 1
        %v2133 = vrot.slane %v1848, 1
        %v2134 = vsel %vm783, %v2132, %v2133
        %2135 = vrot.lane.b32.xlu0 %v2092, 8
        %v2136 = vpop.permute.xlu0 %2135
        %2137 = vrot.lane.b32.xlu0 %v2095, 8
        %v2138 = vpop.permute.xlu0 %2137
        %2139 = vrot.lane.b32.xlu0 %v2098, 8
        %v2140 = vpop.permute.xlu0 %2139
        %2141 = vrot.lane.b32.xlu0 %v2101, 8
        %v2142 = vpop.permute.xlu0 %2141
        %2143 = vrot.lane.b32.xlu0 %v2104, 8
        %v2144 = vpop.permute.xlu0 %2143
        %2145 = vrot.lane.b32.xlu0 %v2107, 8
        %v2146 = vpop.permute.xlu0 %2145
        %2147 = vrot.lane.b32.xlu0 %v2110, 8
        %v2148 = vpop.permute.xlu0 %2147
        %2149 = vrot.lane.b32.xlu0 %v2113, 8
        %v2150 = vpop.permute.xlu0 %2149
        %2151 = vrot.lane.b32.xlu0 %v2116, 8
        %v2152 = vpop.permute.xlu0 %2151
        %2153 = vrot.lane.b32.xlu0 %v2119, 8
        %v2154 = vpop.permute.xlu0 %2153
        %2155 = vrot.lane.b32.xlu0 %v2122, 8
        %v2156 = vpop.permute.xlu0 %2155
        %2157 = vrot.lane.b32.xlu0 %v2125, 8
        %v2158 = vpop.permute.xlu0 %2157
        %2159 = vrot.lane.b32.xlu0 %v2128, 8
        %v2160 = vpop.permute.xlu0 %2159
        %2161 = vrot.lane.b32.xlu0 %v2131, 8
        %v2162 = vpop.permute.xlu0 %2161
        %2163 = vrot.lane.b32.xlu0 %v2134, 8
        %v2164 = vpop.permute.xlu0 %2163
        %2166 = vrot.lane.b32.xlu0 %v1818, 12
        %v2167 = vpop.permute.xlu0 %2166
        %2168 = vrot.lane.b32.xlu0 %v1819, 12
        %v2169 = vpop.permute.xlu0 %2168
        %2170 = vrot.lane.b32.xlu0 %v1820, 12
        %v2171 = vpop.permute.xlu0 %2170
        %2172 = vrot.lane.b32.xlu0 %v1821, 12
        %v2173 = vpop.permute.xlu0 %2172
        %2174 = vrot.lane.b32.xlu0 %v1822, 12
        %v2175 = vpop.permute.xlu0 %2174
        %2176 = vrot.lane.b32.xlu0 %v1823, 12
        %v2177 = vpop.permute.xlu0 %2176
        %2178 = vrot.lane.b32.xlu0 %v1824, 12
        %v2179 = vpop.permute.xlu0 %2178
        %2180 = vrot.lane.b32.xlu0 %v1825, 12
        %v2181 = vpop.permute.xlu0 %2180
        %2182 = vrot.lane.b32.xlu0 %v1826, 12
        %v2183 = vpop.permute.xlu0 %2182
        %2184 = vrot.lane.b32.xlu0 %v1827, 12
        %v2185 = vpop.permute.xlu0 %2184
        %2186 = vrot.lane.b32.xlu0 %v1828, 12
        %v2187 = vpop.permute.xlu0 %2186
        %2188 = vrot.lane.b32.xlu0 %v1829, 12
        %v2189 = vpop.permute.xlu0 %2188
        %2190 = vrot.lane.b32.xlu0 %v1830, 12
        %v2191 = vpop.permute.xlu0 %2190
        %2192 = vrot.lane.b32.xlu0 %v1831, 12
        %v2193 = vpop.permute.xlu0 %2192
        %2194 = vrot.lane.b32.xlu0 %v1832, 12
        %v2195 = vpop.permute.xlu0 %2194
        %2196 = vrot.lane.b32.xlu0 %v1833, 12
        %v2197 = vpop.permute.xlu0 %2196
        %v2199 = vshrl.u32 %v1833, 16
        %v2201 = vshll.u32 %v1833, 16
        %v2203 = vrot.slane %v2201, 1
        %v2204 = vor.u32 %v2199, %v2203
        %v2206 = vshll.u32 %v1849, 16
        %v2208 = vrot.slane %v2206, 1
        %v2209 = vsel %vm526, %v2204, %v2208
        %2210 = vrot.lane.b32.xlu0 %v1861, 16
        %v2211 = vpop.permute.xlu0 %2210
        %2212 = vrot.lane.b32.xlu0 %v1873, 16
        %v2213 = vpop.permute.xlu0 %2212
        %2214 = vrot.lane.b32.xlu0 %v1885, 16
        %v2215 = vpop.permute.xlu0 %2214
        %2216 = vrot.lane.b32.xlu0 %v1897, 16
        %v2217 = vpop.permute.xlu0 %2216
        %2218 = vrot.lane.b32.xlu0 %v1909, 16
        %v2219 = vpop.permute.xlu0 %2218
        %2220 = vrot.lane.b32.xlu0 %v1921, 16
        %v2221 = vpop.permute.xlu0 %2220
        %2222 = vrot.lane.b32.xlu0 %v1933, 16
        %v2223 = vpop.permute.xlu0 %2222
        %2224 = vrot.lane.b32.xlu0 %v1945, 16
        %v2225 = vpop.permute.xlu0 %2224
        %2226 = vrot.lane.b32.xlu0 %v1957, 16
        %v2227 = vpop.permute.xlu0 %2226
        %2228 = vrot.lane.b32.xlu0 %v1969, 16
        %v2229 = vpop.permute.xlu0 %2228
        %2230 = vrot.lane.b32.xlu0 %v1981, 16
        %v2231 = vpop.permute.xlu0 %2230
        %2232 = vrot.lane.b32.xlu0 %v1993, 16
        %v2233 = vpop.permute.xlu0 %2232
        %2234 = vrot.lane.b32.xlu0 %v2005, 16
        %v2235 = vpop.permute.xlu0 %2234
        %2236 = vrot.lane.b32.xlu0 %v2017, 16
        %v2237 = vpop.permute.xlu0 %2236
        %2238 = vrot.lane.b32.xlu0 %v2029, 16
        %v2239 = vpop.permute.xlu0 %2238
        %2240 = vrot.lane.b32.xlu0 %v2209, 16
        %v2241 = vpop.permute.xlu0 %2240
        %v2243 = vrot.slane %v1833, 1
        %v2244 = vrot.slane %v1849, 1
        %v2245 = vsel %vm783, %v2243, %v2244
        %2246 = vrot.lane.b32.xlu0 %v2092, 20
        %v2247 = vpop.permute.xlu0 %2246
        %2248 = vrot.lane.b32.xlu0 %v2095, 20
        %v2249 = vpop.permute.xlu0 %2248
        %2250 = vrot.lane.b32.xlu0 %v2098, 20
        %v2251 = vpop.permute.xlu0 %2250
        %2252 = vrot.lane.b32.xlu0 %v2101, 20
        %v2253 = vpop.permute.xlu0 %2252
        %2254 = vrot.lane.b32.xlu0 %v2104, 20
        %v2255 = vpop.permute.xlu0 %2254
        %2256 = vrot.lane.b32.xlu0 %v2107, 20
        %v2257 = vpop.permute.xlu0 %2256
        %2258 = vrot.lane.b32.xlu0 %v2110, 20
        %v2259 = vpop.permute.xlu0 %2258
        %2260 = vrot.lane.b32.xlu0 %v2113, 20
        %v2261 = vpop.permute.xlu0 %2260
        %2262 = vrot.lane.b32.xlu0 %v2116, 20
        %v2263 = vpop.permute.xlu0 %2262
        %2264 = vrot.lane.b32.xlu0 %v2119, 20
        %v2265 = vpop.permute.xlu0 %2264
        %2266 = vrot.lane.b32.xlu0 %v2122, 20
        %v2267 = vpop.permute.xlu0 %2266
        %2268 = vrot.lane.b32.xlu0 %v2125, 20
        %v2269 = vpop.permute.xlu0 %2268
        %2270 = vrot.lane.b32.xlu0 %v2128, 20
        %v2271 = vpop.permute.xlu0 %2270
        %2272 = vrot.lane.b32.xlu0 %v2131, 20
        %v2273 = vpop.permute.xlu0 %2272
        %2274 = vrot.lane.b32.xlu0 %v2134, 20
        %v2275 = vpop.permute.xlu0 %2274
        %2276 = vrot.lane.b32.xlu0 %v2245, 20
        %v2277 = vpop.permute.xlu0 %2276
        %2278 = vrot.lane.b32.xlu0 %v1819, 24
        %v2279 = vpop.permute.xlu0 %2278
        %2280 = vrot.lane.b32.xlu0 %v1820, 24
        %v2281 = vpop.permute.xlu0 %2280
        %2282 = vrot.lane.b32.xlu0 %v1821, 24
        %v2283 = vpop.permute.xlu0 %2282
        %2284 = vrot.lane.b32.xlu0 %v1822, 24
        %v2285 = vpop.permute.xlu0 %2284
        %2286 = vrot.lane.b32.xlu0 %v1823, 24
        %v2287 = vpop.permute.xlu0 %2286
        %2288 = vrot.lane.b32.xlu0 %v1824, 24
        %v2289 = vpop.permute.xlu0 %2288
        %2290 = vrot.lane.b32.xlu0 %v1825, 24
        %v2291 = vpop.permute.xlu0 %2290
        %2292 = vrot.lane.b32.xlu0 %v1826, 24
        %v2293 = vpop.permute.xlu0 %2292
        %2294 = vrot.lane.b32.xlu0 %v1827, 24
        %v2295 = vpop.permute.xlu0 %2294
        %2296 = vrot.lane.b32.xlu0 %v1828, 24
        %v2297 = vpop.permute.xlu0 %2296
        %2298 = vrot.lane.b32.xlu0 %v1829, 24
        %v2299 = vpop.permute.xlu0 %2298
        %2300 = vrot.lane.b32.xlu0 %v1830, 24
        %v2301 = vpop.permute.xlu0 %2300
        %2302 = vrot.lane.b32.xlu0 %v1831, 24
        %v2303 = vpop.permute.xlu0 %2302
        %2304 = vrot.lane.b32.xlu0 %v1832, 24
        %v2305 = vpop.permute.xlu0 %2304
        %2306 = vrot.lane.b32.xlu0 %v1833, 24
        %v2307 = vpop.permute.xlu0 %2306
        %2308 = vrot.lane.b32.xlu0 %v1873, 28
        %v2309 = vpop.permute.xlu0 %2308
        %2310 = vrot.lane.b32.xlu0 %v1885, 28
        %v2311 = vpop.permute.xlu0 %2310
        %2312 = vrot.lane.b32.xlu0 %v1897, 28
        %v2313 = vpop.permute.xlu0 %2312
        %2314 = vrot.lane.b32.xlu0 %v1909, 28
        %v2315 = vpop.permute.xlu0 %2314
        %2316 = vrot.lane.b32.xlu0 %v1921, 28
        %v2317 = vpop.permute.xlu0 %2316
        %2318 = vrot.lane.b32.xlu0 %v1933, 28
        %v2319 = vpop.permute.xlu0 %2318
        %2320 = vrot.lane.b32.xlu0 %v1945, 28
        %v2321 = vpop.permute.xlu0 %2320
        %2322 = vrot.lane.b32.xlu0 %v1957, 28
        %v2323 = vpop.permute.xlu0 %2322
        %2324 = vrot.lane.b32.xlu0 %v1969, 28
        %v2325 = vpop.permute.xlu0 %2324
        %2326 = vrot.lane.b32.xlu0 %v1981, 28
        %v2327 = vpop.permute.xlu0 %2326
        %2328 = vrot.lane.b32.xlu0 %v1993, 28
        %v2329 = vpop.permute.xlu0 %2328
        %2330 = vrot.lane.b32.xlu0 %v2005, 28
        %v2331 = vpop.permute.xlu0 %2330
        %2332 = vrot.lane.b32.xlu0 %v2017, 28
        %v2333 = vpop.permute.xlu0 %2332
        %2334 = vrot.lane.b32.xlu0 %v2029, 28
        %v2335 = vpop.permute.xlu0 %2334
        %2336 = vrot.lane.b32.xlu0 %v2209, 28
        %v2337 = vpop.permute.xlu0 %2336
        %2338 = vrot.lane.b32.xlu0 %v2095, 32
        %v2339 = vpop.permute.xlu0 %2338
        %2340 = vrot.lane.b32.xlu0 %v2098, 32
        %v2341 = vpop.permute.xlu0 %2340
        %2342 = vrot.lane.b32.xlu0 %v2101, 32
        %v2343 = vpop.permute.xlu0 %2342
        %2344 = vrot.lane.b32.xlu0 %v2104, 32
        %v2345 = vpop.permute.xlu0 %2344
        %2346 = vrot.lane.b32.xlu0 %v2107, 32
        %v2347 = vpop.permute.xlu0 %2346
        %2348 = vrot.lane.b32.xlu0 %v2110, 32
        %v2349 = vpop.permute.xlu0 %2348
        %2350 = vrot.lane.b32.xlu0 %v2113, 32
        %v2351 = vpop.permute.xlu0 %2350
        %2352 = vrot.lane.b32.xlu0 %v2116, 32
        %v2353 = vpop.permute.xlu0 %2352
        %2354 = vrot.lane.b32.xlu0 %v2119, 32
        %v2355 = vpop.permute.xlu0 %2354
        %2356 = vrot.lane.b32.xlu0 %v2122, 32
        %v2357 = vpop.permute.xlu0 %2356
        %2358 = vrot.lane.b32.xlu0 %v2125, 32
        %v2359 = vpop.permute.xlu0 %2358
        %2360 = vrot.lane.b32.xlu0 %v2128, 32
        %v2361 = vpop.permute.xlu0 %2360
        %2362 = vrot.lane.b32.xlu0 %v2131, 32
        %v2363 = vpop.permute.xlu0 %2362
        %2364 = vrot.lane.b32.xlu0 %v2134, 32
        %v2365 = vpop.permute.xlu0 %2364
        %2366 = vrot.lane.b32.xlu0 %v2245, 32
        %v2367 = vpop.permute.xlu0 %2366
        %v2369 = vsel %vm1073, %v1818, %v2031
        %v2371 = vsel %vm1073, %v1819, %v2033
        %v2373 = vsel %vm1073, %v1820, %v2035
        %v2375 = vsel %vm1073, %v1821, %v2037
        %v2377 = vsel %vm1073, %v1822, %v2039
        %v2379 = vsel %vm1073, %v1823, %v2041
        %v2381 = vsel %vm1073, %v1824, %v2043
        %v2383 = vsel %vm1073, %v1825, %v2045
        %v2385 = vsel %vm1073, %v1826, %v2047
        %v2387 = vsel %vm1073, %v1827, %v2049
        %v2389 = vsel %vm1073, %v1828, %v2051
        %v2391 = vsel %vm1073, %v1829, %v2053
        %v2393 = vsel %vm1073, %v1830, %v2055
        %v2395 = vsel %vm1073, %v1831, %v2057
        %v2397 = vsel %vm1073, %v1832, %v2059
        %v2399 = vsel %vm1106, %v2369, %v2136
        %v2401 = vsel %vm1106, %v2371, %v2138
        %v2403 = vsel %vm1106, %v2373, %v2140
        %v2405 = vsel %vm1106, %v2375, %v2142
        %v2407 = vsel %vm1106, %v2377, %v2144
        %v2409 = vsel %vm1106, %v2379, %v2146
        %v2411 = vsel %vm1106, %v2381, %v2148
        %v2413 = vsel %vm1106, %v2383, %v2150
        %v2415 = vsel %vm1106, %v2385, %v2152
        %v2417 = vsel %vm1106, %v2387, %v2154
        %v2419 = vsel %vm1106, %v2389, %v2156
        %v2421 = vsel %vm1106, %v2391, %v2158
        %v2423 = vsel %vm1106, %v2393, %v2160
        %v2425 = vsel %vm1106, %v2395, %v2162
        %v2427 = vsel %vm1106, %v2397, %v2164
        %v2429 = vsel %vm1139, %v1108, %v2167
        %v2431 = vsel %vm1139, %v2399, %v2169
        %v2433 = vsel %vm1139, %v2401, %v2171
        %v2435 = vsel %vm1139, %v2403, %v2173
        %v2437 = vsel %vm1139, %v2405, %v2175
        %v2439 = vsel %vm1139, %v2407, %v2177
        %v2441 = vsel %vm1139, %v2409, %v2179
        %v2443 = vsel %vm1139, %v2411, %v2181
        %v2445 = vsel %vm1139, %v2413, %v2183
        %v2447 = vsel %vm1139, %v2415, %v2185
        %v2449 = vsel %vm1139, %v2417, %v2187
        %v2451 = vsel %vm1139, %v2419, %v2189
        %v2453 = vsel %vm1139, %v2421, %v2191
        %v2455 = vsel %vm1139, %v2423, %v2193
        %v2457 = vsel %vm1139, %v2425, %v2195
        %v2459 = vsel %vm1139, %v2427, %v2197
        %v2461 = vsel %vm1172, %v2429, %v2211
        %v2463 = vsel %vm1172, %v2431, %v2213
        %v2465 = vsel %vm1172, %v2433, %v2215
        %v2467 = vsel %vm1172, %v2435, %v2217
        %v2469 = vsel %vm1172, %v2437, %v2219
        %v2471 = vsel %vm1172, %v2439, %v2221
        %v2473 = vsel %vm1172, %v2441, %v2223
        %v2475 = vsel %vm1172, %v2443, %v2225
        %v2477 = vsel %vm1172, %v2445, %v2227
        %v2479 = vsel %vm1172, %v2447, %v2229
        %v2481 = vsel %vm1172, %v2449, %v2231
        %v2483 = vsel %vm1172, %v2451, %v2233
        %v2485 = vsel %vm1172, %v2453, %v2235
        %v2487 = vsel %vm1172, %v2455, %v2237
        %v2489 = vsel %vm1172, %v2457, %v2239
        %v2491 = vsel %vm1172, %v2459, %v2241
        %v2493 = vsel %vm1205, %v2461, %v2247
        %v2495 = vsel %vm1205, %v2463, %v2249
        %v2497 = vsel %vm1205, %v2465, %v2251
        %v2499 = vsel %vm1205, %v2467, %v2253
        %v2501 = vsel %vm1205, %v2469, %v2255
        %v2503 = vsel %vm1205, %v2471, %v2257
        %v2505 = vsel %vm1205, %v2473, %v2259
        %v2507 = vsel %vm1205, %v2475, %v2261
        %v2509 = vsel %vm1205, %v2477, %v2263
        %v2511 = vsel %vm1205, %v2479, %v2265
        %v2513 = vsel %vm1205, %v2481, %v2267
        %v2515 = vsel %vm1205, %v2483, %v2269
        %v2517 = vsel %vm1205, %v2485, %v2271
        %v2519 = vsel %vm1205, %v2487, %v2273
        %v2521 = vsel %vm1205, %v2489, %v2275
        %v2523 = vsel %vm1205, %v2491, %v2277
        %v2525 = vsel %vm1238, %v2493, %v2279
        %v2527 = vsel %vm1238, %v2495, %v2281
        %v2529 = vsel %vm1238, %v2497, %v2283
        %v2531 = vsel %vm1238, %v2499, %v2285
        %v2533 = vsel %vm1238, %v2501, %v2287
        %v2535 = vsel %vm1238, %v2503, %v2289
        %v2537 = vsel %vm1238, %v2505, %v2291
        %v2539 = vsel %vm1238, %v2507, %v2293
        %v2541 = vsel %vm1238, %v2509, %v2295
        %v2543 = vsel %vm1238, %v2511, %v2297
        %v2545 = vsel %vm1238, %v2513, %v2299
        %v2547 = vsel %vm1238, %v2515, %v2301
        %v2549 = vsel %vm1238, %v2517, %v2303
        %v2551 = vsel %vm1238, %v2519, %v2305
        %v2553 = vsel %vm1238, %v2521, %v2307
        %v2554 = vsel %vm1238, %v2523, %v1008
        %v2556 = vsel %vm1271, %v2525, %v2309
        %v2558 = vsel %vm1271, %v2527, %v2311
        %v2560 = vsel %vm1271, %v2529, %v2313
        %v2562 = vsel %vm1271, %v2531, %v2315
        %v2564 = vsel %vm1271, %v2533, %v2317
        %v2566 = vsel %vm1271, %v2535, %v2319
        %v2568 = vsel %vm1271, %v2537, %v2321
        %v2570 = vsel %vm1271, %v2539, %v2323
        %v2572 = vsel %vm1271, %v2541, %v2325
        %v2574 = vsel %vm1271, %v2543, %v2327
        %v2576 = vsel %vm1271, %v2545, %v2329
        %v2578 = vsel %vm1271, %v2547, %v2331
        %v2580 = vsel %vm1271, %v2549, %v2333
        %v2582 = vsel %vm1271, %v2551, %v2335
        %v2584 = vsel %vm1271, %v2553, %v2337
        %v2585 = vsel %vm1271, %v2554, %v1040
        %v2587 = vsel %vm1304, %v2556, %v2339
        %v2589 = vsel %vm1304, %v2558, %v2341
        %v2591 = vsel %vm1304, %v2560, %v2343
        %v2593 = vsel %vm1304, %v2562, %v2345
        %v2595 = vsel %vm1304, %v2564, %v2347
        %v2597 = vsel %vm1304, %v2566, %v2349
        %v2599 = vsel %vm1304, %v2568, %v2351
        %v2601 = vsel %vm1304, %v2570, %v2353
        %v2603 = vsel %vm1304, %v2572, %v2355
        %v2605 = vsel %vm1304, %v2574, %v2357
        %v2607 = vsel %vm1304, %v2576, %v2359
        %v2609 = vsel %vm1304, %v2578, %v2361
        %v2611 = vsel %vm1304, %v2580, %v2363
        %v2613 = vsel %vm1304, %v2582, %v2365
        %v2615 = vsel %vm1304, %v2584, %v2367
        %v2616 = vsel %vm1304, %v2585, %v1072
        %2617 = vrot.lane.b32.xlu0 %v320, 36
        %v2618 = vpop.permute.xlu0 %2617
        %2619 = vrot.lane.b32.xlu0 %v321, 36
        %v2620 = vpop.permute.xlu0 %2619
        %2621 = vrot.lane.b32.xlu0 %v322, 36
        %v2622 = vpop.permute.xlu0 %2621
        %2623 = vrot.lane.b32.xlu0 %v323, 36
        %v2624 = vpop.permute.xlu0 %2623
        %2625 = vrot.lane.b32.xlu0 %v324, 36
        %v2626 = vpop.permute.xlu0 %2625
        %2627 = vrot.lane.b32.xlu0 %v325, 36
        %v2628 = vpop.permute.xlu0 %2627
        %2629 = vrot.lane.b32.xlu0 %v326, 36
        %v2630 = vpop.permute.xlu0 %2629
        %2631 = vrot.lane.b32.xlu0 %v327, 36
        %v2632 = vpop.permute.xlu0 %2631
        %2633 = vrot.lane.b32.xlu0 %v328, 36
        %v2634 = vpop.permute.xlu0 %2633
        %2635 = vrot.lane.b32.xlu0 %v329, 36
        %v2636 = vpop.permute.xlu0 %2635
        %2637 = vrot.lane.b32.xlu0 %v330, 36
        %v2638 = vpop.permute.xlu0 %2637
        %2639 = vrot.lane.b32.xlu0 %v331, 36
        %v2640 = vpop.permute.xlu0 %2639
        %2641 = vrot.lane.b32.xlu0 %v332, 36
        %v2642 = vpop.permute.xlu0 %2641
        %2643 = vrot.lane.b32.xlu0 %v333, 36
        %v2644 = vpop.permute.xlu0 %2643
        %2645 = vrot.lane.b32.xlu0 %v334, 36
        %v2646 = vpop.permute.xlu0 %2645
        %2647 = vrot.lane.b32.xlu0 %v335, 36
        %v2648 = vpop.permute.xlu0 %2647
        %v2650 = vsel %vm1364, %v2587, %v2618
        %v2652 = vsel %vm1364, %v2589, %v2620
        %v2654 = vsel %vm1364, %v2591, %v2622
        %v2656 = vsel %vm1364, %v2593, %v2624
        %v2658 = vsel %vm1364, %v2595, %v2626
        %v2660 = vsel %vm1364, %v2597, %v2628
        %v2662 = vsel %vm1364, %v2599, %v2630
        %v2664 = vsel %vm1364, %v2601, %v2632
        %v2666 = vsel %vm1364, %v2603, %v2634
        %v2668 = vsel %vm1364, %v2605, %v2636
        %v2670 = vsel %vm1364, %v2607, %v2638
        %v2672 = vsel %vm1364, %v2609, %v2640
        %v2674 = vsel %vm1364, %v2611, %v2642
        %v2676 = vsel %vm1364, %v2613, %v2644
        %v2678 = vsel %vm1364, %v2615, %v2646
        %v2680 = vsel %vm1364, %v2616, %v2648
        %v2681 = vld [vmem:[%s3] sm:$0x3]
        %v2682 = vld [vmem:[%s4] sm:$0xf]
        %2684 = vset.pattern.permute.xlu0 0
        %2685 = vperm.xlu0 %2684, %v2682
        %v2686 = vpop.permute.xlu0 %2685
        %vm2688 = vcmask 326656
        %v2690 = vsel %vm2688, %v2681, 0
        %v2692 = vsel %vm2688, %v2650, 0
        %v2694 = vsel %vm2688, %v2652, 0
        %v2696 = vsel %vm2688, %v2654, 0
        %v2698 = vsel %vm2688, %v2656, 0
        %v2700 = vsel %vm2688, %v2658, 0
        %v2702 = vsel %vm2688, %v2660, 0
        %v2704 = vsel %vm2688, %v2662, 0
        %v2706 = vsel %vm2688, %v2664, 0
        %v2708 = vsel %vm2688, %v2666, 0
        %v2710 = vsel %vm2688, %v2668, 0
        %v2712 = vsel %vm2688, %v2670, 0
        %v2714 = vsel %vm2688, %v2672, 0
        %v2716 = vsel %vm2688, %v2674, 0
        %v2718 = vsel %vm2688, %v2676, 0
        %v2720 = vsel %vm2688, %v2678, 0
        %v2722 = vsel %vm2688, %v2680, 0
        %2724 = vmatprep.subr.bf16.mxu0 0
        %2725 = vmatpush1.bf16.xpose.msra.mxu0 %v2692
        %2726 = vmatprep.subr.bf16.mxu0 0
        %2727 = vmatpush1.bf16.xpose.msra.mxu0 %v2694
        %2728 = vmatprep.subr.bf16.mxu0 0
        %2729 = vmatpush1.bf16.xpose.msra.mxu0 %v2696
        %2730 = vmatprep.subr.bf16.mxu0 0
        %2731 = vmatpush1.bf16.xpose.msra.mxu0 %v2698
        %2732 = vmatprep.subr.bf16.mxu0 0
        %2733 = vmatpush1.bf16.xpose.msra.mxu0 %v2700
        %2734 = vmatprep.subr.bf16.mxu0 0
        %2735 = vmatpush1.bf16.xpose.msra.mxu0 %v2702
        %2736 = vmatprep.subr.bf16.mxu0 0
        %2737 = vmatpush1.bf16.xpose.msra.mxu0 %v2704
        %2738 = vmatprep.subr.bf16.mxu0 0
        %2739 = vmatpush1.bf16.xpose.msra.mxu0 %v2706
        %2740 = vmatprep.subr.bf16.mxu0 0
        %2741 = vmatpush1.bf16.xpose.msra.mxu0 %v2708
        %2742 = vmatprep.subr.bf16.mxu0 0
        %2743 = vmatpush1.bf16.xpose.msra.mxu0 %v2710
        %2744 = vmatprep.subr.bf16.mxu0 0
        %2745 = vmatpush1.bf16.xpose.msra.mxu0 %v2712
        %2746 = vmatprep.subr.bf16.mxu0 0
        %2747 = vmatpush1.bf16.xpose.msra.mxu0 %v2714
        %2748 = vmatprep.subr.bf16.mxu0 0
        %2749 = vmatpush1.bf16.xpose.msra.mxu0 %v2716
        %2750 = vmatprep.subr.bf16.mxu0 0
        %2751 = vmatpush1.bf16.xpose.msra.mxu0 %v2718
        %2752 = vmatprep.subr.bf16.mxu0 0
        %2753 = vmatpush1.bf16.xpose.msra.mxu0 %v2720
        %2754 = vmatprep.subr.bf16.mxu0 0
        %2755 = vmatpush1.bf16.xpose.msra.mxu0 %v2722
        %2756 = vmatprep.mubr.bf16.mxu0 0
        %2757 = vmatmul.mubr.bf16.gmra.mrb[0].mxu0 %v2690
        %v2758 = vpop.f32.mrb[0].mxu0
        %v2759 = vadd.f32 %v2686, %v2758
        %v2760 = vpop.f32.mrb[0].mxu0
        %v2761 = vadd.f32 %v2686, %v2760
        %v2762 = vpop.f32.mrb[0].mxu0
        %v2763 = vpop.f32.mrb[0].mxu0
        %2764 = vdwg.mxu0
        %vm2765 = vcmp.gt.f32.partialorder %v2759, 0.0
        %vm2766 = vcmp.gt.f32.partialorder %v2761, 0.0
        %v2767 = vmul.f32 %v2759, 0.2
        %v2768 = vmul.f32 %v2761, 0.2
        %v2769 = vsel %vm2765, %v2759, %v2767
        %v2770 = vsel %vm2766, %v2761, %v2768
        %v2773 = vcombine.low %v2769, %v2770
        %2775 = vst [vmem:[%s217] sm:$0xff] %v2773
        %s2776 = sand.u32 %s137, 1
        %s2777 = scalar_lea.sflag [#allocation3], %s2776
        %s2778 = sand.u32 %s137, 1
        %s2779 = smul.addr %s2778, 8
        %s2780 = scalar_lea.vmem [#allocation2], %s2779
        // Predicated region
        $region41: #{tpu_custom_call.1} parent=39 // pred_check
          %p2781 = pneg %p147
        $region42: #{tpu_custom_call.1} parent=39 // pred_check_branch
          %2783 = sbr.rel (%p2781) target = $region44
        $region43: #{tpu_custom_call.1} parent=39 // pred_region
          %s2785 = ssub.s32 128, 128
          %2786 = vsyncadd %s2777, %s2785
          %s2787 = smul.addr %s19, 2
          %s2788 = smul.addr %s2787, 64
          %s2789 = scalar_lea.hbm %s5, %s2788
          %s2791 = sshll.u32 %s2780, 4
          %s2792 = int_to_ptr.vmem [resolvable:$true] %s2791
          %2794 = dma.vmem_to_hbm [thread:$0]  %s2792, 128, %s2789, %s2777
        $region44: #{tpu_custom_call.1} parent=39 // pred_fallthru
          _
      $region40: #{tpu_custom_call.1} parent=5 // pred_fallthru
        _
      %p2795 = scmp.le.s32.totalorder 2, %s14
      // Predicated region
      $region45: #{tpu_custom_call.1} parent=5 // pred_check
        %p2796 = pneg %p2795
      $region46: #{tpu_custom_call.1} parent=5 // pred_check_branch
        %2798 = sbr.rel (%p2796) target = $region48
      $region47: #{tpu_custom_call.1} parent=5 // pred_region
        %s2799 = ssub.s32 %s14, 2
        // Predicated region
        $region49: #{tpu_custom_call.1} parent=47 // pred_check
          %p2800 = pneg %p153
        $region50: #{tpu_custom_call.1} parent=47 // pred_check_branch
          %2802 = sbr.rel (%p2800) target = $region52
        $region51: #{tpu_custom_call.1} parent=47 // pred_region
          %s2803 = sand.u32 %s138, 1
          %s2804 = scalar_lea.sflag [#allocation3], %s2803
          %s2805 = sand.u32 %s138, 1
          %s2806 = smul.addr %s2805, 8
          %s2807 = scalar_lea.vmem [#allocation2], %s2806
          %2808 = dma.done %s2804, 128
        $region52: #{tpu_custom_call.1} parent=47 // pred_fallthru
          _
      $region48: #{tpu_custom_call.1} parent=5 // pred_fallthru
        _
    $region6: #{tpu_custom_call.1} parent=1 // loop_footer
      %s18 = sadd.s32 1, %s14
    $region7: #{tpu_custom_call.1} parent=1 // loop_footer_branch
      %13 = sbr.rel target = $region3
    $region8: #{tpu_custom_call.1} parent=1 // loop_exit
      _
    %2809 = vsyncpa [#allocation3], 1
    %s2810 = scalar_lea.sflag [#allocation3], 1
    %2811 = vsyncpa %s2810, 1

</llo_original>
